<compile_context>
chip_gen: v7x
topology: tpu7x:2x2x1
jax: 0.10.0
libtpu: 0.0.40
codegen_flags: <defaults>
</compile_context>

<pallas_src>
import jax
import jax.numpy as jnp
from jax.experimental import pallas as pl
from jax.experimental.pallas import tpu as pltpu


def _round_up(x, m):
    return ((x + m - 1) // m) * m


# --------------------------------------------------------------------------
# Kernel: one (row-tile, hidden-tile) step.
# --------------------------------------------------------------------------
def _ffn_kernel(x_ref, w1_ref, b1_ref, w2_ref, b2_ref, out_ref, acc_ref):
    # x_ref  : (tile_m, d_model)
    # w1_ref : (d_model, tile_h)   -- W1^T slice (pre-transposed in wrapper)
    # b1_ref : (1, tile_h)         -- f32 bias slice
    # w2_ref : (tile_h, d_model)   -- W2^T slice
    # b2_ref : (1, d_model)        -- f32 bias
    # acc_ref: (tile_m, d_model)   -- f32 accumulator (VMEM scratch)
    j = pl.program_id(1)

    @pl.when(j == 0)
    def _():
        acc_ref[...] = jnp.zeros_like(acc_ref)

    # linear1 slice + bias + ReLU (MXU matmul, f32 accumulate, f32 epilogue).
    h = jnp.dot(x_ref[...], w1_ref[...], preferred_element_type=jnp.float32)
    h = jnp.maximum(h + b1_ref[...].astype(jnp.float32), 0.0)

    # TODO(synk): nn.Dropout(p=0.1) is identity in eval mode; training-mode
    # masking (pltpu.prng_seed + pltpu.stateful_bernoulli + 1/(1-p) scale) is
    # not emitted here.

    # Partial linear2: this hidden slice's contribution, accumulated in f32.
    acc_ref[...] += jnp.dot(h.astype(w2_ref.dtype), w2_ref[...],
                            preferred_element_type=jnp.float32)

    @pl.when(j == pl.num_programs(1) - 1)
    def _():
        out_ref[...] = (acc_ref[...] + b2_ref[...].astype(jnp.float32)
                        ).astype(out_ref.dtype)


# --------------------------------------------------------------------------
# Parameter prep: do the transposes ONCE (at init), never per forward call.
# --------------------------------------------------------------------------
def prepare_ffn_params(w1, b1, w2, b2, compute_dtype=None):
    """w1:(hidden,d_model)  b1:(hidden,)  w2:(d_model,hidden)  b2:(d_model,).

    Returns (w1_t, b1_2d, w2_t, b2_2d) with weights transposed to (in, out)
    layout and optionally cast to `compute_dtype` (e.g. bf16 for the MXU).
    Biases stay f32 (epilogue runs in f32 on all generations).
    """
    hidden, d_model = w1.shape
    assert b1.shape == (hidden,)
    assert w2.shape == (d_model, hidden)
    assert b2.shape == (d_model,)
    w1_t = w1.T                       # (d_model, hidden)
    w2_t = w2.T                       # (hidden, d_model)
    if compute_dtype is not None:
        w1_t = w1_t.astype(compute_dtype)
        w2_t = w2_t.astype(compute_dtype)
    b1_2d = b1.reshape(1, hidden).astype(jnp.float32)
    b2_2d = b2.reshape(1, d_model).astype(jnp.float32)
    return w1_t, b1_2d, w2_t, b2_2d


def _choose_tiles(M, hidden):
    # Row tile: 256 (middle of the recommended 256-512 range; bounds the f32
    # h/accumulator live set while amortizing the ~0.35 us/step overhead).
    tile_m = 256
    if M < tile_m:
        tile_m = max(8, _round_up(M, 8))
    # Hidden tile: largest lane-aligned divisor <= 512 (<=512 keeps the f32 h
    # intermediate off the single vector-store slot on v5e); else full hidden.
    tile_h = hidden
    if hidden > 512:
        for cand in (512, 384, 256, 128):
            if hidden % cand == 0:
                tile_h = cand
                break
    return tile_m, tile_h


def _vmem_budget_bytes(tile_m, tile_h, d_model, op_itemsize, out_itemsize):
    # Double-buffered streamed operands + single-buffered b2 + f32 accumulator.
    need = (2 * tile_m * d_model * op_itemsize          # x tiles
            + 2 * d_model * tile_h * op_itemsize        # W1^T slices
            + 2 * tile_h * 4                            # b1 slices
            + 2 * tile_h * d_model * op_itemsize        # W2^T slices
            + d_model * 4                               # b2 (single buffer)
            + 2 * tile_m * d_model * out_itemsize       # out tiles
            + tile_m * d_model * 4)                     # accumulator scratch
    # Headroom for Mosaic internal scratch; cap at 48 MiB so we never ask for
    # v7x's entire 64 MiB physical VMEM per TensorCore.
    return min(max(int(need * 1.25) + (4 << 20), 16 << 20), 48 << 20)


# --------------------------------------------------------------------------
# Forward wrapper.
# --------------------------------------------------------------------------
def position_wise_feed_forward(x, w1_t, b1_2d, w2_t, b2_2d, *,
                               tile_m=None, tile_h=None):
    """x: (..., d_model); params from prepare_ffn_params()."""
    orig_shape = x.shape
    d_model = orig_shape[-1]
    hidden = w1_t.shape[1]
    assert w1_t.shape == (d_model, hidden)
    assert w2_t.shape == (hidden, d_model)
    assert b1_2d.shape == (1, hidden)
    assert b2_2d.shape == (1, d_model)

    # Flatten batch*seq into the matmul M dimension.
    x2 = x.reshape(-1, d_model)
    M = x2.shape[0]

    auto_m, auto_h = _choose_tiles(M, hidden)
    tm = tile_m or auto_m
    th = tile_h or auto_h
    assert hidden % th == 0, "tile_h must divide hidden"

    # Pad rows up to a tile multiple (handles arbitrary batch*seq); padded
    # rows are computed and sliced off below.
    M_pad = _round_up(M, tm)
    if M_pad != M:
        x2 = jnp.pad(x2, ((0, M_pad - M), (0, 0)))

    # Match x to the weight compute dtype so the MXU sees uniform operands
    # (bf16 when prepare_ffn_params was called with compute_dtype=bf16).
    if x2.dtype != w1_t.dtype:
        x2 = x2.astype(w1_t.dtype)

    num_h = hidden // th
    grid = (M_pad // tm, num_h)

    # Streamed weight slices change every hidden step -> keep double buffering
    # for DMA/compute overlap.  When the whole hidden dim is one tile their
    # block index is constant, so a single buffer halves resident VMEM.
    wt_mode = pl.Buffered(2) if num_h > 1 else pl.Buffered(1)

    vmem_bytes = _vmem_budget_bytes(
        tm, th, d_model, jnp.dtype(w1_t.dtype).itemsize,
        jnp.dtype(x.dtype).itemsize)

    out = pl.pallas_call(
        _ffn_kernel,
        out_shape=jax.ShapeDtypeStruct((M_pad, d_model), x.dtype),
        grid_spec=pltpu.PrefetchScalarGridSpec(
            num_scalar_prefetch=0,
            grid=grid,
            in_specs=[
                pl.BlockSpec((tm, d_model), lambda i, j: (i, 0)),       # x rows
                pl.BlockSpec((d_model, th), lambda i, j: (0, j),
                             pipeline_mode=wt_mode),                    # W1^T slice
                pl.BlockSpec((1, th), lambda i, j: (0, j),
                             pipeline_mode=wt_mode),                    # b1 slice
                pl.BlockSpec((th, d_model), lambda i, j: (j, 0),
                             pipeline_mode=wt_mode),                    # W2^T slice
                pl.BlockSpec((1, d_model), lambda i, j: (0, 0),
                             pipeline_mode=pl.Buffered(1)),             # b2 (constant)
            ],
            out_specs=pl.BlockSpec((tm, d_model), lambda i, j: (i, 0)),
            scratch_shapes=[pltpu.VMEM((tm, d_model), jnp.float32)],
        ),
        compiler_params=pltpu.CompilerParams(
            dimension_semantics=("parallel", "arbitrary"),
            vmem_limit_bytes=vmem_bytes,
        ),
    )(x2, w1_t, b1_2d, w2_t, b2_2d)

    if M_pad != M:
        out = out[:M]
    return out.reshape(orig_shape)


def _reference(x, w1, b1, w2, b2):
    # Pure-JAX mirror of the PyTorch forward (dropout in eval mode = identity).
    h = x @ w1.T + b1
    h = jnp.maximum(h, 0.0)
    return h @ w2.T + b2


if __name__ == "__main__":
    key = jax.random.PRNGKey(0)
    # Small but representative: batch*seq = 122 is NOT a multiple of the row
    # tile (exercises the padded last tile); hidden=1024 with tile_h=512
    # exercises the hidden-axis accumulator path.
    batch, seq, d_model, hidden = 2, 61, 128, 1024
    kx, kw1, kb1, kw2, kb2 = jax.random.split(key, 5)

    x = jax.random.normal(kx, (batch, seq, d_model), dtype=jnp.float32)
    w1 = jax.random.normal(kw1, (hidden, d_model), dtype=jnp.float32) * (d_model ** -0.5)
    b1 = jax.random.normal(kb1, (hidden,), dtype=jnp.float32) * 0.01
    w2 = jax.random.normal(kw2, (d_model, hidden), dtype=jnp.float32) * (hidden ** -0.5)
    b2 = jax.random.normal(kb2, (d_model,), dtype=jnp.float32) * 0.01

    ref = _reference(x, w1, b1, w2, b2)

    # f32-operand path: tight tolerance against the f32 reference.
    params_f32 = prepare_ffn_params(w1, b1, w2, b2)          # hoisted, once
    out = position_wise_feed_forward(x, *params_f32)
    jax.block_until_ready(out)
    assert out.shape == ref.shape
    assert jnp.allclose(out, ref, atol=1e-4, rtol=1e-4)

    # bf16-operand path (MXU-friendly on v5e/v6e/v7x), looser tolerance since
    # operands are downcast while accumulation stays f32.
    params_bf16 = prepare_ffn_params(w1, b1, w2, b2, compute_dtype=jnp.bfloat16)
    out_bf16 = position_wise_feed_forward(x, *params_bf16)
    jax.block_until_ready(out_bf16)
    assert jnp.allclose(out_bf16, ref, atol=5e-2, rtol=5e-2)

    print("KERNEL_OK")
</pallas_src>

<mosaic_0001>
module attributes {stable_mosaic.version = 11 : i64} {
  func.func @_ffn_kernel(%arg0: i32, %arg1: i32, %arg2: memref<128x128xf32, #tpu.memory_space<vmem>>, %arg3: memref<128x512xf32, #tpu.memory_space<vmem>>, %arg4: memref<1x512xf32, #tpu.memory_space<vmem>>, %arg5: memref<512x128xf32, #tpu.memory_space<vmem>>, %arg6: memref<1x128xf32, #tpu.memory_space<vmem>>, %arg7: memref<128x128xf32, #tpu.memory_space<vmem>>, %arg8: memref<128x128xf32, #tpu.memory_space<vmem>>) attributes {dimension_semantics = [#tpu.dimension_semantics<parallel>, #tpu.dimension_semantics<arbitrary>], iteration_bounds = array<i64: 1, 2>, scalar_prefetch = 0 : i64, scratch_operands = 1 : i64, tpu.core_type = #tpu.core_type<tc>, window_params = [{transform_indices = @transform_0, window_bounds = array<i64: 128, 128>}, {pipeline_mode = #tpu.pipeline_mode<double_buffered>, transform_indices = @transform_1, window_bounds = array<i64: 128, 512>}, {pipeline_mode = #tpu.pipeline_mode<double_buffered>, transform_indices = @transform_2, window_bounds = array<i64: 1, 512>}, {pipeline_mode = #tpu.pipeline_mode<double_buffered>, transform_indices = @transform_3, window_bounds = array<i64: 512, 128>}, {pipeline_mode = #tpu.pipeline_mode<synchronous>, transform_indices = @transform_4, window_bounds = array<i64: 1, 128>}, {transform_indices = @transform_5, window_bounds = array<i64: 128, 128>}]} {
    %c0_i32 = arith.constant 0 : i32
    %0 = arith.cmpi eq, %arg1, %c0_i32 : i32
    %1 = arith.extui %0 : i1 to i32
    %c0_i32_0 = arith.constant 0 : i32
    %2 = arith.cmpi ne, %1, %c0_i32_0 : i32
    scf.if %2 {
      %cst_15 = arith.constant 0.000000e+00 : f32
      %19 = vector.broadcast %cst_15 : f32 to vector<128x128xf32>
      %c0_16 = arith.constant 0 : index
      %c0_17 = arith.constant 0 : index
      %20 = vector.load %arg8[%c0_16, %c0_17] : memref<128x128xf32, #tpu.memory_space<vmem>>, vector<128x128xf32>
      tpu.vector_store %arg8[%c0_16, %c0_17], %19 {strides = array<i32>} : memref<128x128xf32, #tpu.memory_space<vmem>>, vector<128x128xf32>,
    } else {
    }
    %c0 = arith.constant 0 : index
    %c0_1 = arith.constant 0 : index
    %3 = vector.load %arg2[%c0, %c0_1] : memref<128x128xf32, #tpu.memory_space<vmem>>, vector<128x128xf32>
    %c0_2 = arith.constant 0 : index
    %c0_3 = arith.constant 0 : index
    %4 = vector.load %arg3[%c0_2, %c0_3] : memref<128x512xf32, #tpu.memory_space<vmem>>, vector<128x512xf32>
    %cst = arith.constant dense<0.000000e+00> : vector<128x512xf32>
    %5 = tpu.matmul %3, %4, %cst {dimension_numbers = #tpu.dot_dimension_numbers<[1], [0], [0], [1], [0, 0, 1, 1], [], []>} : vector<128x128xf32>, vector<128x512xf32>, vector<128x512xf32> -> vector<128x512xf32>
    %c0_4 = arith.constant 0 : index
    %c0_5 = arith.constant 0 : index
    %6 = vector.load %arg4[%c0_4, %c0_5] : memref<1x512xf32, #tpu.memory_space<vmem>>, vector<1x512xf32>
    %7 = vector.broadcast %6 : vector<1x512xf32> to vector<128x512xf32>
    %8 = arith.addf %5, %7 : vector<128x512xf32>
    %cst_6 = arith.constant 0.000000e+00 : f32
    %9 = vector.broadcast %cst_6 : f32 to vector<128x512xf32>
    %10 = arith.maximumf %8, %9 : vector<128x512xf32>
    %c0_7 = arith.constant 0 : index
    %c0_8 = arith.constant 0 : index
    %11 = vector.load %arg8[%c0_7, %c0_8] : memref<128x128xf32, #tpu.memory_space<vmem>>, vector<128x128xf32>
    %c0_9 = arith.constant 0 : index
    %c0_10 = arith.constant 0 : index
    %12 = vector.load %arg5[%c0_9, %c0_10] : memref<512x128xf32, #tpu.memory_space<vmem>>, vector<512x128xf32>
    %cst_11 = arith.constant dense<0.000000e+00> : vector<128x128xf32>
    %13 = tpu.matmul %10, %12, %cst_11 {dimension_numbers = #tpu.dot_dimension_numbers<[1], [0], [0], [1], [0, 0, 1, 1], [], []>} : vector<128x512xf32>, vector<512x128xf32>, vector<128x128xf32> -> vector<128x128xf32>
    %14 = arith.addf %11, %13 : vector<128x128xf32>
    %c0_12 = arith.constant 0 : index
    %c0_13 = arith.constant 0 : index
    %15 = vector.load %arg8[%c0_12, %c0_13] : memref<128x128xf32, #tpu.memory_space<vmem>>, vector<128x128xf32>
    tpu.vector_store %arg8[%c0_12, %c0_13], %14 {strides = array<i32>} : memref<128x128xf32, #tpu.memory_space<vmem>>, vector<128x128xf32>,
    %c1_i32 = arith.constant 1 : i32
    %16 = arith.cmpi eq, %arg1, %c1_i32 : i32
    %17 = arith.extui %16 : i1 to i32
    %c0_i32_14 = arith.constant 0 : i32
    %18 = arith.cmpi ne, %17, %c0_i32_14 : i32
    scf.if %18 {
      %c0_15 = arith.constant 0 : index
      %c0_16 = arith.constant 0 : index
      %19 = vector.load %arg8[%c0_15, %c0_16] : memref<128x128xf32, #tpu.memory_space<vmem>>, vector<128x128xf32>
      %c0_17 = arith.constant 0 : index
      %c0_18 = arith.constant 0 : index
      %20 = vector.load %arg6[%c0_17, %c0_18] : memref<1x128xf32, #tpu.memory_space<vmem>>, vector<1x128xf32>
      %21 = vector.broadcast %20 : vector<1x128xf32> to vector<128x128xf32>
      %22 = arith.addf %19, %21 : vector<128x128xf32>
      %c0_19 = arith.constant 0 : index
      %c0_20 = arith.constant 0 : index
      %23 = vector.load %arg7[%c0_19, %c0_20] : memref<128x128xf32, #tpu.memory_space<vmem>>, vector<128x128xf32>
      tpu.vector_store %arg7[%c0_19, %c0_20], %22 {strides = array<i32>} : memref<128x128xf32, #tpu.memory_space<vmem>>, vector<128x128xf32>,
    } else {
    }
    return
  }
  func.func @transform_0(%arg0: i32, %arg1: i32) -> (i32, i32) {
    %c0_i32 = arith.constant 0 : i32
    %c0_i32_0 = arith.constant 0 : i32
    return %arg0, %c0_i32 : i32, i32
  }
  func.func @transform_1(%arg0: i32, %arg1: i32) -> (i32, i32) {
    %c0_i32 = arith.constant 0 : i32
    %c0_i32_0 = arith.constant 0 : i32
    return %c0_i32, %arg1 : i32, i32
  }
  func.func @transform_2(%arg0: i32, %arg1: i32) -> (i32, i32) {
    %c0_i32 = arith.constant 0 : i32
    %c0_i32_0 = arith.constant 0 : i32
    return %c0_i32, %arg1 : i32, i32
  }
  func.func @transform_3(%arg0: i32, %arg1: i32) -> (i32, i32) {
    %c0_i32 = arith.constant 0 : i32
    %c0_i32_0 = arith.constant 0 : i32
    return %arg1, %c0_i32 : i32, i32
  }
  func.func @transform_4(%arg0: i32, %arg1: i32) -> (i32, i32) {
    %c0_i32 = arith.constant 0 : i32
    %c0_i32_0 = arith.constant 0 : i32
    %c0_i32_1 = arith.constant 0 : i32
    return %c0_i32, %c0_i32_0 : i32, i32
  }
  func.func @transform_5(%arg0: i32, %arg1: i32) -> (i32, i32) {
    %c0_i32 = arith.constant 0 : i32
    %c0_i32_0 = arith.constant 0 : i32
    return %arg0, %c0_i32 : i32, i32
  }
}

</mosaic_0001>

<llo_original>
// kernel: tpu_custom_call.1
$region0: #{tpu_custom_call.1}
  #allocation0 [shape = 'u32[]', space=smem, size = 0x4, offset = 0x4, fixed_abs, tag = 'smem constant byte address 0x4 - core index']
  #allocation1 [shape = 'u32[144,128]{1,0:T(1,128)}', space=vmem, size = 0x12000, scoped, tag = 'internal scratch']
  #allocation2 [shape = 'f32[128,128]{1,0:T(8,128)}', space=vmem, size = 0x10000, scoped, tag = 'scratch operand']
  %s0 = inlined_call_operand.hbm [shape: f32[128,128], index: 0, kind: input, shape index: {}]
  %s1 = inlined_call_operand.hbm [shape: f32[128,1024], index: 1, kind: input, shape index: {}]
  %s2 = inlined_call_operand.hbm [shape: f32[1,1024], index: 2, kind: input, shape index: {}]
  %s3 = inlined_call_operand.hbm [shape: f32[1024,128], index: 3, kind: input, shape index: {}]
  %s4 = inlined_call_operand.vmem [shape: f32[1,128], index: 4, kind: input, shape index: {}]
  %s5 = inlined_call_operand.hbm [shape: f32[128,128], index: 5, kind: output, shape index: {}]
  %s6 = sld [smem:[#allocation0]]
  $region77: #{tpu_custom_call.1} parent=0
    _
  %s8 = ssub.s32 1, %s6
  %s9 = scalar_select 0, %s8, %s6
  $region1: #{tpu_custom_call.1} parent=0
    #allocation3 [shape = 'u8[65536]{0}', space=vmem, size = 0x10000, scoped, tag = 'input window, operand 0, single buffered']
    #allocation4 [shape = 's32[2]{0}', space=sflag, size = 0x8, scoped, tag = 'scoped memory for tpu_custom_call.1']
    #allocation5 [shape = 's32[2]{0}', space=sflag, size = 0x8, scoped, tag = 'scoped memory for tpu_custom_call.1']
    #allocation6 [shape = 'u8[524288]{0}', space=vmem, size = 0x80000, scoped, tag = 'input window, operand 1']
    #allocation7 [shape = 's32[2]{0}', space=sflag, size = 0x8, scoped, tag = 'scoped memory for tpu_custom_call.1']
    #allocation8 [shape = 'u8[4096]{0}', space=vmem, size = 0x1000, scoped, tag = 'input window, operand 2']
    #allocation9 [shape = 'u8[524288]{0}', space=vmem, size = 0x80000, scoped, tag = 'input window, operand 3']
    #allocation10 [shape = 's32[2]{0}', space=sflag, size = 0x8, scoped, tag = 'scoped memory for tpu_custom_call.1']
    #allocation11 [shape = 'u8[65536]{0}', space=vmem, size = 0x10000, scoped, tag = 'output window, operand 0, single buffered']
    %10 = vsyncpa [#allocation4], 0
    %11 = vsyncpa [#allocation7], 0
    %s12 = scalar_lea.sflag [#allocation7], 1
    %13 = vsyncpa %s12, 0
    %14 = vsyncpa [#allocation10], 0
    %s15 = scalar_lea.sflag [#allocation10], 1
    %16 = vsyncpa %s15, 0
    %17 = vsyncpa [#allocation5], 0
    loop: start=0, step=1, limit=4
    $region2: #{tpu_custom_call.1} parent=1 // loop_pre_header
      _
    $region3: #{tpu_custom_call.1} parent=1 // loop_header
      %s19 = sphi 0, %s23
      %p20 = scmp.ge.s32.totalorder %s19, 4
      %s26 = sphi 0, %s38
      %s27 = sphi 0, %s34
      %s28 = sphi 0, %s26
      %s29 = sphi 0, %s27
      %s30 = sphi 0, %s28
      %s31 = sphi 0, %s29
      %s41 = sphi 0, %s43
      %s44 = sphi 0, %s41
      %s45 = sphi 0, %s44
      %s61 = sphi 0, %s45
      %s67 = sphi 0, %s69
      %s70 = sphi 0, %s67
      %s71 = sphi 0, %s70
      %s87 = sphi 0, %s71
      %s93 = sphi 0, %s95
      %s96 = sphi 0, %s93
      %s97 = sphi 0, %s96
      %s113 = sphi 0, %s97
      %s119 = sphi 0, %s121
      %s122 = sphi 0, %s119
      %s123 = sphi 0, %s122
      %s139 = sphi 0, %s123
      %s143 = sphi 0, %s143
      %s145 = sphi 0, %s143
      %s146 = sphi 0, %s145
      %s160 = sphi 0, %s146
      %s166 = sphi 0, %s168
      %s169 = sphi 0, %s166
      %s170 = sphi 0, %s169
      %s186 = sphi 0, %s170
    $region4: #{tpu_custom_call.1} parent=1 // loop_header_branch
      %22 = sbr.rel (%p20) target = $region8
    $region5: #{tpu_custom_call.1} parent=1 // loop_body
      %s24 = ssub.s32 %s19, 1
      %s25 = ssub.s32 %s19, 2
      %s32 = sadd.s32 1, %s27
      %p33 = scmp.ge.s32.totalorder %s32, 2
      %s34 = scalar_select %p33, 0, %s32
      %s35 = sadd.s32 1, %s26
      %s36 = scalar_select %p33, %s35, %s26
      %p37 = scmp.ge.s32.totalorder %s36, 1
      %s38 = scalar_select %p37, 0, %s36
      %s39 = ssub.s32 %s26, %s38
      %p40 = scmp.eq.s32.totalorder %s39, 0
      %s42 = sadd.s32 %s41, 1
      %s43 = scalar_select %p40, %s41, %s42
      %p46 = pneg %p40
      %p47 = scmp.eq.s32.totalorder %s19, 1
      %p48 = por %p46, %p47
      %p49 = scmp.ne.s32.totalorder %s41, %s44
      %p50 = scmp.eq.s32.totalorder %s19, 0
      %p51 = por %p49, %p50
      %p52 = scmp.ne.s32.totalorder %s41, %s44
      %p53 = scmp.eq.s32.totalorder %s24, 1
      %p54 = por %p52, %p53
      %p55 = scmp.ne.s32.totalorder %s44, %s45
      %p56 = scmp.eq.s32.totalorder %s24, 0
      %p57 = por %p55, %p56
      %p58 = scmp.ne.s32.totalorder %s44, %s45
      %p59 = scmp.eq.s32.totalorder %s25, 1
      %p60 = por %p58, %p59
      %p62 = scmp.ne.s32.totalorder %s45, %s61
      %p63 = scmp.eq.s32.totalorder %s25, 0
      %p64 = por %p62, %p63
      %s65 = ssub.s32 %s27, %s34
      %p66 = scmp.eq.s32.totalorder %s65, 0
      %s68 = sadd.s32 %s67, 1
      %s69 = scalar_select %p66, %s67, %s68
      %p72 = pneg %p66
      %p73 = scmp.eq.s32.totalorder %s19, 1
      %p74 = por %p72, %p73
      %p75 = scmp.ne.s32.totalorder %s67, %s70
      %p76 = scmp.eq.s32.totalorder %s19, 0
      %p77 = por %p75, %p76
      %p78 = scmp.ne.s32.totalorder %s67, %s70
      %p79 = scmp.eq.s32.totalorder %s24, 1
      %p80 = por %p78, %p79
      %p81 = scmp.ne.s32.totalorder %s70, %s71
      %p82 = scmp.eq.s32.totalorder %s24, 0
      %p83 = por %p81, %p82
      %p84 = scmp.ne.s32.totalorder %s70, %s71
      %p85 = scmp.eq.s32.totalorder %s25, 1
      %p86 = por %p84, %p85
      %p88 = scmp.ne.s32.totalorder %s71, %s87
      %p89 = scmp.eq.s32.totalorder %s25, 0
      %p90 = por %p88, %p89
      %s91 = ssub.s32 %s27, %s34
      %p92 = scmp.eq.s32.totalorder %s91, 0
      %s94 = sadd.s32 %s93, 1
      %s95 = scalar_select %p92, %s93, %s94
      %p98 = pneg %p92
      %p99 = scmp.eq.s32.totalorder %s19, 1
      %p100 = por %p98, %p99
      %p101 = scmp.ne.s32.totalorder %s93, %s96
      %p102 = scmp.eq.s32.totalorder %s19, 0
      %p103 = por %p101, %p102
      %p104 = scmp.ne.s32.totalorder %s93, %s96
      %p105 = scmp.eq.s32.totalorder %s24, 1
      %p106 = por %p104, %p105
      %p107 = scmp.ne.s32.totalorder %s96, %s97
      %p108 = scmp.eq.s32.totalorder %s24, 0
      %p109 = por %p107, %p108
      %p110 = scmp.ne.s32.totalorder %s96, %s97
      %p111 = scmp.eq.s32.totalorder %s25, 1
      %p112 = por %p110, %p111
      %p114 = scmp.ne.s32.totalorder %s97, %s113
      %p115 = scmp.eq.s32.totalorder %s25, 0
      %p116 = por %p114, %p115
      %s117 = ssub.s32 %s27, %s34
      %p118 = scmp.eq.s32.totalorder %s117, 0
      %s120 = sadd.s32 %s119, 1
      %s121 = scalar_select %p118, %s119, %s120
      %p124 = pneg %p118
      %p125 = scmp.eq.s32.totalorder %s19, 1
      %p126 = por %p124, %p125
      %p127 = scmp.ne.s32.totalorder %s119, %s122
      %p128 = scmp.eq.s32.totalorder %s19, 0
      %p129 = por %p127, %p128
      %p130 = scmp.ne.s32.totalorder %s119, %s122
      %p131 = scmp.eq.s32.totalorder %s24, 1
      %p132 = por %p130, %p131
      %p133 = scmp.ne.s32.totalorder %s122, %s123
      %p134 = scmp.eq.s32.totalorder %s24, 0
      %p135 = por %p133, %p134
      %p136 = scmp.ne.s32.totalorder %s122, %s123
      %p137 = scmp.eq.s32.totalorder %s25, 1
      %p138 = por %p136, %p137
      %p140 = scmp.ne.s32.totalorder %s123, %s139
      %p141 = scmp.eq.s32.totalorder %s25, 0
      %p142 = por %p140, %p141
      %s144 = sadd.s32 %s143, 1
      %p147 = scmp.eq.s32.totalorder %s19, 1
      %p148 = scmp.ne.s32.totalorder %s143, %s145
      %p149 = scmp.eq.s32.totalorder %s19, 0
      %p150 = por %p148, %p149
      %p151 = scmp.ne.s32.totalorder %s143, %s145
      %p152 = scmp.eq.s32.totalorder %s24, 1
      %p153 = por %p151, %p152
      %p154 = scmp.ne.s32.totalorder %s145, %s146
      %p155 = scmp.eq.s32.totalorder %s24, 0
      %p156 = por %p154, %p155
      %p157 = scmp.ne.s32.totalorder %s145, %s146
      %p158 = scmp.eq.s32.totalorder %s25, 1
      %p159 = por %p157, %p158
      %p161 = scmp.ne.s32.totalorder %s146, %s160
      %p162 = scmp.eq.s32.totalorder %s25, 0
      %p163 = por %p161, %p162
      %s164 = ssub.s32 %s26, %s38
      %p165 = scmp.eq.s32.totalorder %s164, 0
      %s167 = sadd.s32 %s166, 1
      %s168 = scalar_select %p165, %s166, %s167
      %p171 = pneg %p165
      %p172 = scmp.eq.s32.totalorder %s19, 1
      %p173 = por %p171, %p172
      %p174 = scmp.ne.s32.totalorder %s166, %s169
      %p175 = scmp.eq.s32.totalorder %s19, 0
      %p176 = por %p174, %p175
      %p177 = scmp.ne.s32.totalorder %s166, %s169
      %p178 = scmp.eq.s32.totalorder %s24, 1
      %p179 = por %p177, %p178
      %p180 = scmp.ne.s32.totalorder %s169, %s170
      %p181 = scmp.eq.s32.totalorder %s24, 0
      %p182 = por %p180, %p181
      %p183 = scmp.ne.s32.totalorder %s169, %s170
      %p184 = scmp.eq.s32.totalorder %s25, 1
      %p185 = por %p183, %p184
      %p187 = scmp.ne.s32.totalorder %s170, %s186
      %p188 = scmp.eq.s32.totalorder %s25, 0
      %p189 = por %p187, %p188
      %p190 = scmp.le.s32.totalorder 1, %s19
      %p191 = scmp.lt.s32.totalorder %s19, 3
      %p192 = pnand %p190, %p191
      %p193 = pneg %p192
      // Predicated region
      $region9: #{tpu_custom_call.1} parent=5 // pred_check
        _
      $region10: #{tpu_custom_call.1} parent=5 // pred_check_branch
        %195 = sbr.rel (%p192) target = $region12
      $region11: #{tpu_custom_call.1} parent=5 // pred_region
        %s196 = ssub.s32 %s19, 1
        // Predicated region
        $region13: #{tpu_custom_call.1} parent=11 // pred_check
          %p197 = pneg %p57
        $region14: #{tpu_custom_call.1} parent=11 // pred_check_branch
          %199 = sbr.rel (%p197) target = $region16
        $region15: #{tpu_custom_call.1} parent=11 // pred_region
          %s200 = smul.u32 16, %s28
          %s202 = ssub.s32 2048, 2048
          %203 = vsyncadd [#allocation4], %s202
          %s204 = smul.addr %s200, 128
          %s205 = scalar_lea.hbm %s0, %s204
          %s206 = sshll.u32 [#allocation3], 4
          %s207 = int_to_ptr.vmem [resolvable:$true] %s206
          %212 = dma.hbm_to_vmem [thread:$0]  %s205, 2048, %s207, [#allocation4], 128, 128, 8
        $region16: #{tpu_custom_call.1} parent=11 // pred_fallthru
          _
        // Predicated region
        $region17: #{tpu_custom_call.1} parent=11 // pred_check
          %p213 = pneg %p156
        $region18: #{tpu_custom_call.1} parent=11 // pred_check_branch
          %215 = sbr.rel (%p213) target = $region20
        $region19: #{tpu_custom_call.1} parent=11 // pred_region
          _
        $region20: #{tpu_custom_call.1} parent=11 // pred_fallthru
          _
      $region12: #{tpu_custom_call.1} parent=5 // pred_fallthru
        _
      %p216 = scmp.lt.s32.totalorder %s19, 2
      // Predicated region
      $region21: #{tpu_custom_call.1} parent=5 // pred_check
        %p217 = pneg %p216
      $region22: #{tpu_custom_call.1} parent=5 // pred_check_branch
        %219 = sbr.rel (%p217) target = $region24
      $region23: #{tpu_custom_call.1} parent=5 // pred_region
        // Predicated region
        $region25: #{tpu_custom_call.1} parent=23 // pred_check
          %p220 = pneg %p77
        $region26: #{tpu_custom_call.1} parent=23 // pred_check_branch
          %222 = sbr.rel (%p220) target = $region28
        $region27: #{tpu_custom_call.1} parent=23 // pred_region
          %s223 = sand.u32 %s19, 1
          %s224 = scalar_lea.sflag [#allocation7], %s223
          %s225 = sand.u32 %s67, 1
          %s226 = smul.addr %s225, 512
          %s227 = scalar_lea.vmem [#allocation6], %s226
          %s228 = smul.u32 4, %s27
          %s230 = ssub.s32 8192, 8192
          %231 = vsyncadd %s224, %s230
          %s232 = smul.addr %s228, 128
          %s233 = scalar_lea.hbm %s1, %s232
          %s234 = sshll.u32 %s227, 4
          %s235 = int_to_ptr.vmem [resolvable:$true] %s234
          %240 = dma.hbm_to_vmem [thread:$0]  %s233, 8192, %s235, %s224, 1024, 512, 32
        $region28: #{tpu_custom_call.1} parent=23 // pred_fallthru
          _
        // Predicated region
        $region29: #{tpu_custom_call.1} parent=23 // pred_check
          %p241 = pneg %p103
        $region30: #{tpu_custom_call.1} parent=23 // pred_check_branch
          %243 = sbr.rel (%p241) target = $region32
        $region31: #{tpu_custom_call.1} parent=23 // pred_region
          %s244 = sand.u32 %s19, 1
          %s245 = scalar_lea.sflag [#allocation7], %s244
          %s246 = sand.u32 %s93, 1
          %s247 = smul.addr %s246, 4
          %s248 = scalar_lea.vmem [#allocation8], %s247
          %s249 = smul.u32 4, %s27
          %s251 = ssub.s32 64, 64
          %252 = vsyncadd %s245, %s251
          %s253 = smul.addr %s249, 16
          %s254 = scalar_lea.hbm %s2, %s253
          %s256 = sshll.u32 %s248, 4
          %s257 = int_to_ptr.vmem [resolvable:$true] %s256
          %259 = dma.hbm_to_vmem [thread:$0]  %s254, 64, %s257, %s245
        $region32: #{tpu_custom_call.1} parent=23 // pred_fallthru
          _
        // Predicated region
        $region33: #{tpu_custom_call.1} parent=23 // pred_check
          %p260 = pneg %p129
        $region34: #{tpu_custom_call.1} parent=23 // pred_check_branch
          %262 = sbr.rel (%p260) target = $region36
        $region35: #{tpu_custom_call.1} parent=23 // pred_region
          %s263 = sand.u32 %s119, 1
          %s264 = scalar_lea.sflag [#allocation10], %s263
          %s265 = sand.u32 %s119, 1
          %s266 = smul.addr %s265, 512
          %s267 = scalar_lea.vmem [#allocation9], %s266
          %s268 = smul.u32 64, %s27
          %s270 = ssub.s32 8192, 8192
          %271 = vsyncadd %s264, %s270
          %s272 = smul.addr %s268, 128
          %s273 = scalar_lea.hbm %s3, %s272
          %s274 = sshll.u32 %s267, 4
          %s275 = int_to_ptr.vmem [resolvable:$true] %s274
          %280 = dma.hbm_to_vmem [thread:$0]  %s273, 8192, %s275, %s264, 128, 128, 8
        $region36: #{tpu_custom_call.1} parent=23 // pred_fallthru
          _
      $region24: #{tpu_custom_call.1} parent=5 // pred_fallthru
        _
      %p281 = scmp.le.s32.totalorder 1, %s19
      %p282 = scmp.lt.s32.totalorder %s19, 3
      %p283 = pnand %p281, %p282
      %p284 = pneg %p283
      // Predicated region
      $region37: #{tpu_custom_call.1} parent=5 // pred_check
        _
      $region38: #{tpu_custom_call.1} parent=5 // pred_check_branch
        %286 = sbr.rel (%p283) target = $region40
      $region39: #{tpu_custom_call.1} parent=5 // pred_region
        %s287 = ssub.s32 %s19, 1
        // Predicated region
        $region41: #{tpu_custom_call.1} parent=39 // pred_check
          %p288 = pneg %p57
        $region42: #{tpu_custom_call.1} parent=39 // pred_check_branch
          %290 = sbr.rel (%p288) target = $region44
        $region43: #{tpu_custom_call.1} parent=39 // pred_region
          %291 = dma.done [#allocation4], 2048
        $region44: #{tpu_custom_call.1} parent=39 // pred_fallthru
          _
        %s292 = sand.u32 %s24, 1
        %s293 = scalar_lea.sflag [#allocation7], %s292
        %s294 = sand.u32 %s70, 1
        %s295 = smul.addr %s294, 512
        %s296 = scalar_lea.vmem [#allocation6], %s295
        // Predicated region
        $region45: #{tpu_custom_call.1} parent=39 // pred_check
          %p297 = pneg %p83
        $region46: #{tpu_custom_call.1} parent=39 // pred_check_branch
          %299 = sbr.rel (%p297) target = $region48
        $region47: #{tpu_custom_call.1} parent=39 // pred_region
          %300 = dma.done %s293, 8192
        $region48: #{tpu_custom_call.1} parent=39 // pred_fallthru
          _
        %s301 = sand.u32 %s24, 1
        %s302 = scalar_lea.sflag [#allocation7], %s301
        %s303 = sand.u32 %s96, 1
        %s304 = smul.addr %s303, 4
        %s305 = scalar_lea.vmem [#allocation8], %s304
        // Predicated region
        $region49: #{tpu_custom_call.1} parent=39 // pred_check
          %p306 = pneg %p109
        $region50: #{tpu_custom_call.1} parent=39 // pred_check_branch
          %308 = sbr.rel (%p306) target = $region52
        $region51: #{tpu_custom_call.1} parent=39 // pred_region
          %309 = dma.done %s302, 64
        $region52: #{tpu_custom_call.1} parent=39 // pred_fallthru
          _
        %s310 = sand.u32 %s122, 1
        %s311 = scalar_lea.sflag [#allocation10], %s310
        %s312 = sand.u32 %s122, 1
        %s313 = smul.addr %s312, 512
        %s314 = scalar_lea.vmem [#allocation9], %s313
        // Predicated region
        $region53: #{tpu_custom_call.1} parent=39 // pred_check
          %p315 = pneg %p135
        $region54: #{tpu_custom_call.1} parent=39 // pred_check_branch
          %317 = sbr.rel (%p315) target = $region56
        $region55: #{tpu_custom_call.1} parent=39 // pred_region
          %318 = dma.done %s311, 8192
        $region56: #{tpu_custom_call.1} parent=39 // pred_fallthru
          _
        %p319 = pneg %p57
        %p320 = pneg %p54
        %s321 = sand.u32 %s24, 1
        %s322 = scalar_lea.sflag [#allocation7], %s321
        %s323 = sand.u32 %s70, 1
        %s324 = smul.addr %s323, 512
        %s325 = scalar_lea.vmem [#allocation6], %s324
        %p326 = pneg %p83
        %p327 = pneg %p80
        %s328 = sand.u32 %s24, 1
        %s329 = scalar_lea.sflag [#allocation7], %s328
        %s330 = sand.u32 %s96, 1
        %s331 = smul.addr %s330, 4
        %s332 = scalar_lea.vmem [#allocation8], %s331
        %p333 = pneg %p109
        %p334 = pneg %p106
        %s335 = sand.u32 %s122, 1
        %s336 = scalar_lea.sflag [#allocation10], %s335
        %s337 = sand.u32 %s122, 1
        %s338 = smul.addr %s337, 512
        %s339 = scalar_lea.vmem [#allocation9], %s338
        %p340 = pneg %p135
        %p341 = pneg %p132
        %p342 = pneg %p156
        %p343 = pneg %p153
        %p344 = pneg %p182
        %p345 = pneg %p179
        %s346 = smul.u32 16, %s28
        %s347 = smul.u32 4, %s29
        %s348 = smul.u32 4, %s29
        %s349 = smul.u32 64, %s29
        %s350 = smul.u32 16, %s28
        %p351 = scmp.eq.s32.totalorder %s29, 0
        // Predicated region
        $region57: #{tpu_custom_call.1} parent=39 // pred_check
          %p352 = pneg %p351
        $region58: #{tpu_custom_call.1} parent=39 // pred_check_branch
          %354 = sbr.rel (%p352) target = $region60
        $region59: #{tpu_custom_call.1} parent=39 // pred_region
          %355 = vst [vmem:[#allocation2] sm:$0xff] 0.0
          %356 = vst [vmem:[#allocation2 + $0x8] sm:$0xff] 0.0
          %357 = vst [vmem:[#allocation2 + $0x10] sm:$0xff] 0.0
          %358 = vst [vmem:[#allocation2 + $0x18] sm:$0xff] 0.0
          %359 = vst [vmem:[#allocation2 + $0x20] sm:$0xff] 0.0
          %360 = vst [vmem:[#allocation2 + $0x28] sm:$0xff] 0.0
          %361 = vst [vmem:[#allocation2 + $0x30] sm:$0xff] 0.0
          %362 = vst [vmem:[#allocation2 + $0x38] sm:$0xff] 0.0
          %363 = vst [vmem:[#allocation2 + $0x40] sm:$0xff] 0.0
          %364 = vst [vmem:[#allocation2 + $0x48] sm:$0xff] 0.0
          %365 = vst [vmem:[#allocation2 + $0x50] sm:$0xff] 0.0
          %366 = vst [vmem:[#allocation2 + $0x58] sm:$0xff] 0.0
          %367 = vst [vmem:[#allocation2 + $0x60] sm:$0xff] 0.0
          %368 = vst [vmem:[#allocation2 + $0x68] sm:$0xff] 0.0
          %369 = vst [vmem:[#allocation2 + $0x70] sm:$0xff] 0.0
          %370 = vst [vmem:[#allocation2 + $0x78] sm:$0xff] 0.0
        $region60: #{tpu_custom_call.1} parent=39 // pred_fallthru
          _
        %v371 = vld [vmem:[#allocation3] sm:$0xff]
        %v372 = vld [vmem:[#allocation3 + $0x8] sm:$0xff]
        %v373 = vld [vmem:[#allocation3 + $0x10] sm:$0xff]
        %v374 = vld [vmem:[#allocation3 + $0x18] sm:$0xff]
        %v375 = vld [vmem:[#allocation3 + $0x20] sm:$0xff]
        %v376 = vld [vmem:[#allocation3 + $0x28] sm:$0xff]
        %v377 = vld [vmem:[#allocation3 + $0x30] sm:$0xff]
        %v378 = vld [vmem:[#allocation3 + $0x38] sm:$0xff]
        %v379 = vld [vmem:[#allocation3 + $0x40] sm:$0xff]
        %v380 = vld [vmem:[#allocation3 + $0x48] sm:$0xff]
        %v381 = vld [vmem:[#allocation3 + $0x50] sm:$0xff]
        %v382 = vld [vmem:[#allocation3 + $0x58] sm:$0xff]
        %v383 = vld [vmem:[#allocation3 + $0x60] sm:$0xff]
        %v384 = vld [vmem:[#allocation3 + $0x68] sm:$0xff]
        %v385 = vld [vmem:[#allocation3 + $0x70] sm:$0xff]
        %v386 = vld [vmem:[#allocation3 + $0x78] sm:$0xff]
        %v387 = vld [vmem:[%s296] sm:$0xff]
        %v388 = vld [vmem:[%s296 + $0x8] sm:$0xff]
        %v389 = vld [vmem:[%s296 + $0x10] sm:$0xff]
        %v390 = vld [vmem:[%s296 + $0x18] sm:$0xff]
        %v391 = vld [vmem:[%s296 + $0x20] sm:$0xff]
        %v392 = vld [vmem:[%s296 + $0x28] sm:$0xff]
        %v393 = vld [vmem:[%s296 + $0x30] sm:$0xff]
        %v394 = vld [vmem:[%s296 + $0x38] sm:$0xff]
        %v395 = vld [vmem:[%s296 + $0x40] sm:$0xff]
        %v396 = vld [vmem:[%s296 + $0x48] sm:$0xff]
        %v397 = vld [vmem:[%s296 + $0x50] sm:$0xff]
        %v398 = vld [vmem:[%s296 + $0x58] sm:$0xff]
        %v399 = vld [vmem:[%s296 + $0x60] sm:$0xff]
        %v400 = vld [vmem:[%s296 + $0x68] sm:$0xff]
        %v401 = vld [vmem:[%s296 + $0x70] sm:$0xff]
        %v402 = vld [vmem:[%s296 + $0x78] sm:$0xff]
        %v403 = vld [vmem:[%s296 + $0x80] sm:$0xff]
        %v404 = vld [vmem:[%s296 + $0x88] sm:$0xff]
        %v405 = vld [vmem:[%s296 + $0x90] sm:$0xff]
        %v406 = vld [vmem:[%s296 + $0x98] sm:$0xff]
        %v407 = vld [vmem:[%s296 + $0xa0] sm:$0xff]
        %v408 = vld [vmem:[%s296 + $0xa8] sm:$0xff]
        %v409 = vld [vmem:[%s296 + $0xb0] sm:$0xff]
        %v410 = vld [vmem:[%s296 + $0xb8] sm:$0xff]
        %v411 = vld [vmem:[%s296 + $0xc0] sm:$0xff]
        %v412 = vld [vmem:[%s296 + $0xc8] sm:$0xff]
        %v413 = vld [vmem:[%s296 + $0xd0] sm:$0xff]
        %v414 = vld [vmem:[%s296 + $0xd8] sm:$0xff]
        %v415 = vld [vmem:[%s296 + $0xe0] sm:$0xff]
        %v416 = vld [vmem:[%s296 + $0xe8] sm:$0xff]
        %v417 = vld [vmem:[%s296 + $0xf0] sm:$0xff]
        %v418 = vld [vmem:[%s296 + $0xf8] sm:$0xff]
        %v419 = vld [vmem:[%s296 + $0x100] sm:$0xff]
        %v420 = vld [vmem:[%s296 + $0x108] sm:$0xff]
        %v421 = vld [vmem:[%s296 + $0x110] sm:$0xff]
        %v422 = vld [vmem:[%s296 + $0x118] sm:$0xff]
        %v423 = vld [vmem:[%s296 + $0x120] sm:$0xff]
        %v424 = vld [vmem:[%s296 + $0x128] sm:$0xff]
        %v425 = vld [vmem:[%s296 + $0x130] sm:$0xff]
        %v426 = vld [vmem:[%s296 + $0x138] sm:$0xff]
        %v427 = vld [vmem:[%s296 + $0x140] sm:$0xff]
        %v428 = vld [vmem:[%s296 + $0x148] sm:$0xff]
        %v429 = vld [vmem:[%s296 + $0x150] sm:$0xff]
        %v430 = vld [vmem:[%s296 + $0x158] sm:$0xff]
        %v431 = vld [vmem:[%s296 + $0x160] sm:$0xff]
        %v432 = vld [vmem:[%s296 + $0x168] sm:$0xff]
        %v433 = vld [vmem:[%s296 + $0x170] sm:$0xff]
        %v434 = vld [vmem:[%s296 + $0x178] sm:$0xff]
        %v435 = vld [vmem:[%s296 + $0x180] sm:$0xff]
        %v436 = vld [vmem:[%s296 + $0x188] sm:$0xff]
        %v437 = vld [vmem:[%s296 + $0x190] sm:$0xff]
        %v438 = vld [vmem:[%s296 + $0x198] sm:$0xff]
        %v439 = vld [vmem:[%s296 + $0x1a0] sm:$0xff]
        %v440 = vld [vmem:[%s296 + $0x1a8] sm:$0xff]
        %v441 = vld [vmem:[%s296 + $0x1b0] sm:$0xff]
        %v442 = vld [vmem:[%s296 + $0x1b8] sm:$0xff]
        %v443 = vld [vmem:[%s296 + $0x1c0] sm:$0xff]
        %v444 = vld [vmem:[%s296 + $0x1c8] sm:$0xff]
        %v445 = vld [vmem:[%s296 + $0x1d0] sm:$0xff]
        %v446 = vld [vmem:[%s296 + $0x1d8] sm:$0xff]
        %v447 = vld [vmem:[%s296 + $0x1e0] sm:$0xff]
        %v448 = vld [vmem:[%s296 + $0x1e8] sm:$0xff]
        %v449 = vld [vmem:[%s296 + $0x1f0] sm:$0xff]
        %v450 = vld [vmem:[%s296 + $0x1f8] sm:$0xff]
        %v451 = vld [vmem:[%s305] sm:$0xf]
        %v453 = vlaneseq
        %v454 = vshrl.u32 %v453, 7
        %v455 = vsub.s32 0, %v454
        %v456 = vrot.slane %v451, %v455
        %v457 = vlaneseq
        %v458 = vshrl.u32 %v457, 7
        %v459 = vsub.s32 1, %v458
        %v460 = vrot.slane %v451, %v459
        %v461 = vlaneseq
        %v462 = vshrl.u32 %v461, 7
        %v463 = vsub.s32 2, %v462
        %v464 = vrot.slane %v451, %v463
        %v465 = vlaneseq
        %v466 = vshrl.u32 %v465, 7
        %v467 = vsub.s32 3, %v466
        %v468 = vrot.slane %v451, %v467
        %473 = vmatprep.subr.mxu0 %v388
        %474 = vmatpush1.msra.mxu0 %v387
        %475 = vmatprep.subr.mxu0 %v392
        %476 = vmatpush1.msra.mxu0 %v391
        %477 = vmatprep.subr.mxu0 %v396
        %478 = vmatpush1.msra.mxu0 %v395
        %479 = vmatprep.subr.mxu0 %v400
        %480 = vmatpush1.msra.mxu0 %v399
        %481 = vmatprep.subr.mxu0 %v404
        %482 = vmatpush1.msra.mxu0 %v403
        %483 = vmatprep.subr.mxu0 %v408
        %484 = vmatpush1.msra.mxu0 %v407
        %485 = vmatprep.subr.mxu0 %v412
        %486 = vmatpush1.msra.mxu0 %v411
        %487 = vmatprep.subr.mxu0 %v416
        %488 = vmatpush1.msra.mxu0 %v415
        %489 = vmatprep.subr.mxu0 %v420
        %490 = vmatpush1.msra.mxu0 %v419
        %491 = vmatprep.subr.mxu0 %v424
        %492 = vmatpush1.msra.mxu0 %v423
        %493 = vmatprep.subr.mxu0 %v428
        %494 = vmatpush1.msra.mxu0 %v427
        %495 = vmatprep.subr.mxu0 %v432
        %496 = vmatpush1.msra.mxu0 %v431
        %497 = vmatprep.subr.mxu0 %v436
        %498 = vmatpush1.msra.mxu0 %v435
        %499 = vmatprep.subr.mxu0 %v440
        %500 = vmatpush1.msra.mxu0 %v439
        %501 = vmatprep.subr.mxu0 %v444
        %502 = vmatpush1.msra.mxu0 %v443
        %503 = vmatprep.subr.mxu0 %v448
        %504 = vmatpush1.msra.mxu0 %v447
        %505 = vmatprep.subr.mxu0 0.0
        %506 = vmatpush1.msra.mxu0 0.0
        %507 = vmatprep.subr.mxu0 0.0
        %508 = vmatpush1.msra.mxu0 0.0
        %509 = vmatprep.subr.mxu0 0.0
        %510 = vmatpush1.msra.mxu0 0.0
        %511 = vmatprep.subr.mxu0 0.0
        %512 = vmatpush1.msra.mxu0 0.0
        %513 = vmatprep.subr.mxu0 0.0
        %514 = vmatpush1.msra.mxu0 0.0
        %515 = vmatprep.subr.mxu0 0.0
        %516 = vmatpush1.msra.mxu0 0.0
        %517 = vmatprep.subr.mxu0 0.0
        %518 = vmatpush1.msra.mxu0 0.0
        %519 = vmatprep.subr.mxu0 0.0
        %520 = vmatpush1.msra.mxu0 0.0
        %521 = vmatprep.subr.mxu0 0.0
        %522 = vmatpush1.msra.mxu0 0.0
        %523 = vmatprep.subr.mxu0 0.0
        %524 = vmatpush1.msra.mxu0 0.0
        %525 = vmatprep.subr.mxu0 0.0
        %526 = vmatpush1.msra.mxu0 0.0
        %527 = vmatprep.subr.mxu0 0.0
        %528 = vmatpush1.msra.mxu0 0.0
        %529 = vmatprep.subr.mxu0 0.0
        %530 = vmatpush1.msra.mxu0 0.0
        %531 = vmatprep.subr.mxu0 0.0
        %532 = vmatpush1.msra.mxu0 0.0
        %533 = vmatprep.subr.mxu0 0.0
        %534 = vmatpush1.msra.mxu0 0.0
        %535 = vmatprep.subr.mxu0 0.0
        %536 = vmatpush1.msra.mxu0 0.0
        %537 = vmatprep.mubr.f32.mxu0 0.0
        %538 = vmatmul.mubr.f32.gmra.mrb[0].mxu0 %v371
        %v539 = vpop.f32.mrb[0].mxu0
        %v540 = vadd.f32 %v456, %v539
        %v541 = vpop.f32.mrb[0].mxu0
        %v542 = vadd.f32 %v460, %v541
        %543 = vmatprep.mubr.f32.mxu0 0.0
        %544 = vmatmul.mubr.f32.gmra.mrb[0].mxu0 %v372
        %v545 = vpop.f32.mrb[0].mxu0
        %v546 = vadd.f32 %v456, %v545
        %v547 = vpop.f32.mrb[0].mxu0
        %v548 = vadd.f32 %v460, %v547
        %549 = vmatprep.mubr.f32.mxu0 0.0
        %550 = vmatmul.mubr.f32.gmra.mrb[0].mxu0 %v373
        %v551 = vpop.f32.mrb[0].mxu0
        %v552 = vadd.f32 %v456, %v551
        %v553 = vpop.f32.mrb[0].mxu0
        %v554 = vadd.f32 %v460, %v553
        %555 = vmatprep.mubr.f32.mxu0 0.0
        %556 = vmatmul.mubr.f32.gmra.mrb[0].mxu0 %v374
        %v557 = vpop.f32.mrb[0].mxu0
        %v558 = vadd.f32 %v456, %v557
        %v559 = vpop.f32.mrb[0].mxu0
        %v560 = vadd.f32 %v460, %v559
        %561 = vmatprep.mubr.f32.mxu0 0.0
        %562 = vmatmul.mubr.f32.gmra.mrb[0].mxu0 %v375
        %v563 = vpop.f32.mrb[0].mxu0
        %v564 = vadd.f32 %v456, %v563
        %v565 = vpop.f32.mrb[0].mxu0
        %v566 = vadd.f32 %v460, %v565
        %567 = vmatprep.mubr.f32.mxu0 0.0
        %568 = vmatmul.mubr.f32.gmra.mrb[0].mxu0 %v376
        %v569 = vpop.f32.mrb[0].mxu0
        %v570 = vadd.f32 %v456, %v569
        %v571 = vpop.f32.mrb[0].mxu0
        %v572 = vadd.f32 %v460, %v571
        %573 = vmatprep.mubr.f32.mxu0 0.0
        %574 = vmatmul.mubr.f32.gmra.mrb[0].mxu0 %v377
        %v575 = vpop.f32.mrb[0].mxu0
        %v576 = vadd.f32 %v456, %v575
        %v577 = vpop.f32.mrb[0].mxu0
        %v578 = vadd.f32 %v460, %v577
        %579 = vmatprep.mubr.f32.mxu0 0.0
        %580 = vmatmul.mubr.f32.gmra.mrb[0].mxu0 %v378
        %v581 = vpop.f32.mrb[0].mxu0
        %v582 = vadd.f32 %v456, %v581
        %v583 = vpop.f32.mrb[0].mxu0
        %v584 = vadd.f32 %v460, %v583
        %585 = vmatprep.mubr.f32.mxu0 0.0
        %586 = vmatmul.mubr.f32.gmra.mrb[0].mxu0 %v379
        %v587 = vpop.f32.mrb[0].mxu0
        %v588 = vadd.f32 %v456, %v587
        %v589 = vpop.f32.mrb[0].mxu0
        %v590 = vadd.f32 %v460, %v589
        %591 = vmatprep.mubr.f32.mxu0 0.0
        %592 = vmatmul.mubr.f32.gmra.mrb[0].mxu0 %v380
        %v593 = vpop.f32.mrb[0].mxu0
        %v594 = vadd.f32 %v456, %v593
        %v595 = vpop.f32.mrb[0].mxu0
        %v596 = vadd.f32 %v460, %v595
        %597 = vmatprep.mubr.f32.mxu0 0.0
        %598 = vmatmul.mubr.f32.gmra.mrb[0].mxu0 %v381
        %v599 = vpop.f32.mrb[0].mxu0
        %v600 = vadd.f32 %v456, %v599
        %v601 = vpop.f32.mrb[0].mxu0
        %v602 = vadd.f32 %v460, %v601
        %603 = vmatprep.mubr.f32.mxu0 0.0
        %604 = vmatmul.mubr.f32.gmra.mrb[0].mxu0 %v382
        %v605 = vpop.f32.mrb[0].mxu0
        %v606 = vadd.f32 %v456, %v605
        %v607 = vpop.f32.mrb[0].mxu0
        %v608 = vadd.f32 %v460, %v607
        %609 = vmatprep.mubr.f32.mxu0 0.0
        %610 = vmatmul.mubr.f32.gmra.mrb[0].mxu0 %v383
        %v611 = vpop.f32.mrb[0].mxu0
        %v612 = vadd.f32 %v456, %v611
        %v613 = vpop.f32.mrb[0].mxu0
        %v614 = vadd.f32 %v460, %v613
        %615 = vmatprep.mubr.f32.mxu0 0.0
        %616 = vmatmul.mubr.f32.gmra.mrb[0].mxu0 %v384
        %v617 = vpop.f32.mrb[0].mxu0
        %v618 = vadd.f32 %v456, %v617
        %v619 = vpop.f32.mrb[0].mxu0
        %v620 = vadd.f32 %v460, %v619
        %621 = vmatprep.mubr.f32.mxu0 0.0
        %622 = vmatmul.mubr.f32.gmra.mrb[0].mxu0 %v385
        %v623 = vpop.f32.mrb[0].mxu0
        %v624 = vadd.f32 %v456, %v623
        %v625 = vpop.f32.mrb[0].mxu0
        %v626 = vadd.f32 %v460, %v625
        %627 = vmatprep.mubr.f32.mxu0 0.0
        %628 = vmatmul.mubr.f32.gmra.mrb[0].mxu0 %v386
        %v629 = vpop.f32.mrb[0].mxu0
        %v630 = vadd.f32 %v456, %v629
        %v631 = vpop.f32.mrb[0].mxu0
        %v632 = vadd.f32 %v460, %v631
        %633 = vdwg.mxu0
        %634 = vmatprep.subr.mxu0 %v390
        %635 = vmatpush1.msra.mxu0 %v389
        %636 = vmatprep.subr.mxu0 %v394
        %637 = vmatpush1.msra.mxu0 %v393
        %638 = vmatprep.subr.mxu0 %v398
        %639 = vmatpush1.msra.mxu0 %v397
        %640 = vmatprep.subr.mxu0 %v402
        %641 = vmatpush1.msra.mxu0 %v401
        %642 = vmatprep.subr.mxu0 %v406
        %643 = vmatpush1.msra.mxu0 %v405
        %644 = vmatprep.subr.mxu0 %v410
        %645 = vmatpush1.msra.mxu0 %v409
        %646 = vmatprep.subr.mxu0 %v414
        %647 = vmatpush1.msra.mxu0 %v413
        %648 = vmatprep.subr.mxu0 %v418
        %649 = vmatpush1.msra.mxu0 %v417
        %650 = vmatprep.subr.mxu0 %v422
        %651 = vmatpush1.msra.mxu0 %v421
        %652 = vmatprep.subr.mxu0 %v426
        %653 = vmatpush1.msra.mxu0 %v425
        %654 = vmatprep.subr.mxu0 %v430
        %655 = vmatpush1.msra.mxu0 %v429
        %656 = vmatprep.subr.mxu0 %v434
        %657 = vmatpush1.msra.mxu0 %v433
        %658 = vmatprep.subr.mxu0 %v438
        %659 = vmatpush1.msra.mxu0 %v437
        %660 = vmatprep.subr.mxu0 %v442
        %661 = vmatpush1.msra.mxu0 %v441
        %662 = vmatprep.subr.mxu0 %v446
        %663 = vmatpush1.msra.mxu0 %v445
        %664 = vmatprep.subr.mxu0 %v450
        %665 = vmatpush1.msra.mxu0 %v449
        %666 = vmatprep.subr.mxu0 0.0
        %667 = vmatpush1.msra.mxu0 0.0
        %668 = vmatprep.subr.mxu0 0.0
        %669 = vmatpush1.msra.mxu0 0.0
        %670 = vmatprep.subr.mxu0 0.0
        %671 = vmatpush1.msra.mxu0 0.0
        %672 = vmatprep.subr.mxu0 0.0
        %673 = vmatpush1.msra.mxu0 0.0
        %674 = vmatprep.subr.mxu0 0.0
        %675 = vmatpush1.msra.mxu0 0.0
        %676 = vmatprep.subr.mxu0 0.0
        %677 = vmatpush1.msra.mxu0 0.0
        %678 = vmatprep.subr.mxu0 0.0
        %679 = vmatpush1.msra.mxu0 0.0
        %680 = vmatprep.subr.mxu0 0.0
        %681 = vmatpush1.msra.mxu0 0.0
        %682 = vmatprep.subr.mxu0 0.0
        %683 = vmatpush1.msra.mxu0 0.0
        %684 = vmatprep.subr.mxu0 0.0
        %685 = vmatpush1.msra.mxu0 0.0
        %686 = vmatprep.subr.mxu0 0.0
        %687 = vmatpush1.msra.mxu0 0.0
        %688 = vmatprep.subr.mxu0 0.0
        %689 = vmatpush1.msra.mxu0 0.0
        %690 = vmatprep.subr.mxu0 0.0
        %691 = vmatpush1.msra.mxu0 0.0
        %692 = vmatprep.subr.mxu0 0.0
        %693 = vmatpush1.msra.mxu0 0.0
        %694 = vmatprep.subr.mxu0 0.0
        %695 = vmatpush1.msra.mxu0 0.0
        %696 = vmatprep.subr.mxu0 0.0
        %697 = vmatpush1.msra.mxu0 0.0
        %698 = vmatprep.mubr.f32.mxu0 0.0
        %699 = vmatmul.mubr.f32.gmra.mrb[0].mxu0 %v371
        %v700 = vpop.f32.mrb[0].mxu0
        %v701 = vadd.f32 %v464, %v700
        %v702 = vpop.f32.mrb[0].mxu0
        %v703 = vadd.f32 %v468, %v702
        %704 = vmatprep.mubr.f32.mxu0 0.0
        %705 = vmatmul.mubr.f32.gmra.mrb[0].mxu0 %v372
        %v706 = vpop.f32.mrb[0].mxu0
        %v707 = vadd.f32 %v464, %v706
        %v708 = vpop.f32.mrb[0].mxu0
        %v709 = vadd.f32 %v468, %v708
        %710 = vmatprep.mubr.f32.mxu0 0.0
        %711 = vmatmul.mubr.f32.gmra.mrb[0].mxu0 %v373
        %v712 = vpop.f32.mrb[0].mxu0
        %v713 = vadd.f32 %v464, %v712
        %v714 = vpop.f32.mrb[0].mxu0
        %v715 = vadd.f32 %v468, %v714
        %716 = vmatprep.mubr.f32.mxu0 0.0
        %717 = vmatmul.mubr.f32.gmra.mrb[0].mxu0 %v374
        %v718 = vpop.f32.mrb[0].mxu0
        %v719 = vadd.f32 %v464, %v718
        %v720 = vpop.f32.mrb[0].mxu0
        %v721 = vadd.f32 %v468, %v720
        %722 = vmatprep.mubr.f32.mxu0 0.0
        %723 = vmatmul.mubr.f32.gmra.mrb[0].mxu0 %v375
        %v724 = vpop.f32.mrb[0].mxu0
        %v725 = vadd.f32 %v464, %v724
        %v726 = vpop.f32.mrb[0].mxu0
        %v727 = vadd.f32 %v468, %v726
        %728 = vmatprep.mubr.f32.mxu0 0.0
        %729 = vmatmul.mubr.f32.gmra.mrb[0].mxu0 %v376
        %v730 = vpop.f32.mrb[0].mxu0
        %v731 = vadd.f32 %v464, %v730
        %v732 = vpop.f32.mrb[0].mxu0
        %v733 = vadd.f32 %v468, %v732
        %734 = vmatprep.mubr.f32.mxu0 0.0
        %735 = vmatmul.mubr.f32.gmra.mrb[0].mxu0 %v377
        %v736 = vpop.f32.mrb[0].mxu0
        %v737 = vadd.f32 %v464, %v736
        %v738 = vpop.f32.mrb[0].mxu0
        %v739 = vadd.f32 %v468, %v738
        %740 = vmatprep.mubr.f32.mxu0 0.0
        %741 = vmatmul.mubr.f32.gmra.mrb[0].mxu0 %v378
        %v742 = vpop.f32.mrb[0].mxu0
        %v743 = vadd.f32 %v464, %v742
        %v744 = vpop.f32.mrb[0].mxu0
        %v745 = vadd.f32 %v468, %v744
        %746 = vmatprep.mubr.f32.mxu0 0.0
        %747 = vmatmul.mubr.f32.gmra.mrb[0].mxu0 %v379
        %v748 = vpop.f32.mrb[0].mxu0
        %v749 = vadd.f32 %v464, %v748
        %v750 = vpop.f32.mrb[0].mxu0
        %v751 = vadd.f32 %v468, %v750
        %752 = vmatprep.mubr.f32.mxu0 0.0
        %753 = vmatmul.mubr.f32.gmra.mrb[0].mxu0 %v380
        %v754 = vpop.f32.mrb[0].mxu0
        %v755 = vadd.f32 %v464, %v754
        %v756 = vpop.f32.mrb[0].mxu0
        %v757 = vadd.f32 %v468, %v756
        %758 = vmatprep.mubr.f32.mxu0 0.0
        %759 = vmatmul.mubr.f32.gmra.mrb[0].mxu0 %v381
        %v760 = vpop.f32.mrb[0].mxu0
        %v761 = vadd.f32 %v464, %v760
        %v762 = vpop.f32.mrb[0].mxu0
        %v763 = vadd.f32 %v468, %v762
        %764 = vmatprep.mubr.f32.mxu0 0.0
        %765 = vmatmul.mubr.f32.gmra.mrb[0].mxu0 %v382
        %v766 = vpop.f32.mrb[0].mxu0
        %v767 = vadd.f32 %v464, %v766
        %v768 = vpop.f32.mrb[0].mxu0
        %v769 = vadd.f32 %v468, %v768
        %770 = vmatprep.mubr.f32.mxu0 0.0
        %771 = vmatmul.mubr.f32.gmra.mrb[0].mxu0 %v383
        %v772 = vpop.f32.mrb[0].mxu0
        %v773 = vadd.f32 %v464, %v772
        %v774 = vpop.f32.mrb[0].mxu0
        %v775 = vadd.f32 %v468, %v774
        %776 = vmatprep.mubr.f32.mxu0 0.0
        %777 = vmatmul.mubr.f32.gmra.mrb[0].mxu0 %v384
        %v778 = vpop.f32.mrb[0].mxu0
        %v779 = vadd.f32 %v464, %v778
        %v780 = vpop.f32.mrb[0].mxu0
        %v781 = vadd.f32 %v468, %v780
        %782 = vmatprep.mubr.f32.mxu0 0.0
        %783 = vmatmul.mubr.f32.gmra.mrb[0].mxu0 %v385
        %v784 = vpop.f32.mrb[0].mxu0
        %v785 = vadd.f32 %v464, %v784
        %v786 = vpop.f32.mrb[0].mxu0
        %v787 = vadd.f32 %v468, %v786
        %788 = vmatprep.mubr.f32.mxu0 0.0
        %789 = vmatmul.mubr.f32.gmra.mrb[0].mxu0 %v386
        %v790 = vpop.f32.mrb[0].mxu0
        %v791 = vadd.f32 %v464, %v790
        %v792 = vpop.f32.mrb[0].mxu0
        %v793 = vadd.f32 %v468, %v792
        %794 = vdwg.mxu0
        %v795 = vmax.f32 %v540, 0.0
        %v796 = vmax.f32 %v542, 0.0
        %v797 = vmax.f32 %v701, 0.0
        %v798 = vmax.f32 %v703, 0.0
        %v799 = vmax.f32 %v546, 0.0
        %v800 = vmax.f32 %v548, 0.0
        %v801 = vmax.f32 %v707, 0.0
        %v802 = vmax.f32 %v709, 0.0
        %v803 = vmax.f32 %v552, 0.0
        %v804 = vmax.f32 %v554, 0.0
        %v805 = vmax.f32 %v713, 0.0
        %v806 = vmax.f32 %v715, 0.0
        %v807 = vmax.f32 %v558, 0.0
        %v808 = vmax.f32 %v560, 0.0
        %v809 = vmax.f32 %v719, 0.0
        %v810 = vmax.f32 %v721, 0.0
        %v811 = vmax.f32 %v564, 0.0
        %v812 = vmax.f32 %v566, 0.0
        %v813 = vmax.f32 %v725, 0.0
        %v814 = vmax.f32 %v727, 0.0
        %v815 = vmax.f32 %v570, 0.0
        %v816 = vmax.f32 %v572, 0.0
        %v817 = vmax.f32 %v731, 0.0
        %v818 = vmax.f32 %v733, 0.0
        %v819 = vmax.f32 %v576, 0.0
        %v820 = vmax.f32 %v578, 0.0
        %v821 = vmax.f32 %v737, 0.0
        %v822 = vmax.f32 %v739, 0.0
        %v823 = vmax.f32 %v582, 0.0
        %v824 = vmax.f32 %v584, 0.0
        %v825 = vmax.f32 %v743, 0.0
        %v826 = vmax.f32 %v745, 0.0
        %v827 = vmax.f32 %v588, 0.0
        %v828 = vmax.f32 %v590, 0.0
        %v829 = vmax.f32 %v749, 0.0
        %v830 = vmax.f32 %v751, 0.0
        %v831 = vmax.f32 %v594, 0.0
        %v832 = vmax.f32 %v596, 0.0
        %v833 = vmax.f32 %v755, 0.0
        %v834 = vmax.f32 %v757, 0.0
        %v835 = vmax.f32 %v600, 0.0
        %v836 = vmax.f32 %v602, 0.0
        %v837 = vmax.f32 %v761, 0.0
        %v838 = vmax.f32 %v763, 0.0
        %v839 = vmax.f32 %v606, 0.0
        %v840 = vmax.f32 %v608, 0.0
        %v841 = vmax.f32 %v767, 0.0
        %v842 = vmax.f32 %v769, 0.0
        %v843 = vmax.f32 %v612, 0.0
        %v844 = vmax.f32 %v614, 0.0
        %v845 = vmax.f32 %v773, 0.0
        %v846 = vmax.f32 %v775, 0.0
        %v847 = vmax.f32 %v618, 0.0
        %v848 = vmax.f32 %v620, 0.0
        %v849 = vmax.f32 %v779, 0.0
        %v850 = vmax.f32 %v781, 0.0
        %v851 = vmax.f32 %v624, 0.0
        %v852 = vmax.f32 %v626, 0.0
        %v853 = vmax.f32 %v785, 0.0
        %v854 = vmax.f32 %v787, 0.0
        %v855 = vmax.f32 %v630, 0.0
        %v856 = vmax.f32 %v632, 0.0
        %v857 = vmax.f32 %v791, 0.0
        %v858 = vmax.f32 %v793, 0.0
        %v859 = vld [vmem:[#allocation2] sm:$0xff]
        %v860 = vld [vmem:[#allocation2 + $0x8] sm:$0xff]
        %v861 = vld [vmem:[#allocation2 + $0x10] sm:$0xff]
        %v862 = vld [vmem:[#allocation2 + $0x18] sm:$0xff]
        %v863 = vld [vmem:[#allocation2 + $0x20] sm:$0xff]
        %v864 = vld [vmem:[#allocation2 + $0x28] sm:$0xff]
        %v865 = vld [vmem:[#allocation2 + $0x30] sm:$0xff]
        %v866 = vld [vmem:[#allocation2 + $0x38] sm:$0xff]
        %v867 = vld [vmem:[#allocation2 + $0x40] sm:$0xff]
        %v868 = vld [vmem:[#allocation2 + $0x48] sm:$0xff]
        %v869 = vld [vmem:[#allocation2 + $0x50] sm:$0xff]
        %v870 = vld [vmem:[#allocation2 + $0x58] sm:$0xff]
        %v871 = vld [vmem:[#allocation2 + $0x60] sm:$0xff]
        %v872 = vld [vmem:[#allocation2 + $0x68] sm:$0xff]
        %v873 = vld [vmem:[#allocation2 + $0x70] sm:$0xff]
        %v874 = vld [vmem:[#allocation2 + $0x78] sm:$0xff]
        %v875 = vld [vmem:[%s314] sm:$0xff]
        %v876 = vld [vmem:[%s314 + $0x8] sm:$0xff]
        %v877 = vld [vmem:[%s314 + $0x10] sm:$0xff]
        %v878 = vld [vmem:[%s314 + $0x18] sm:$0xff]
        %v879 = vld [vmem:[%s314 + $0x20] sm:$0xff]
        %v880 = vld [vmem:[%s314 + $0x28] sm:$0xff]
        %v881 = vld [vmem:[%s314 + $0x30] sm:$0xff]
        %v882 = vld [vmem:[%s314 + $0x38] sm:$0xff]
        %v883 = vld [vmem:[%s314 + $0x40] sm:$0xff]
        %v884 = vld [vmem:[%s314 + $0x48] sm:$0xff]
        %v885 = vld [vmem:[%s314 + $0x50] sm:$0xff]
        %v886 = vld [vmem:[%s314 + $0x58] sm:$0xff]
        %v887 = vld [vmem:[%s314 + $0x60] sm:$0xff]
        %v888 = vld [vmem:[%s314 + $0x68] sm:$0xff]
        %v889 = vld [vmem:[%s314 + $0x70] sm:$0xff]
        %v890 = vld [vmem:[%s314 + $0x78] sm:$0xff]
        %v891 = vld [vmem:[%s314 + $0x80] sm:$0xff]
        %v892 = vld [vmem:[%s314 + $0x88] sm:$0xff]
        %v893 = vld [vmem:[%s314 + $0x90] sm:$0xff]
        %v894 = vld [vmem:[%s314 + $0x98] sm:$0xff]
        %v895 = vld [vmem:[%s314 + $0xa0] sm:$0xff]
        %v896 = vld [vmem:[%s314 + $0xa8] sm:$0xff]
        %v897 = vld [vmem:[%s314 + $0xb0] sm:$0xff]
        %v898 = vld [vmem:[%s314 + $0xb8] sm:$0xff]
        %v899 = vld [vmem:[%s314 + $0xc0] sm:$0xff]
        %v900 = vld [vmem:[%s314 + $0xc8] sm:$0xff]
        %v901 = vld [vmem:[%s314 + $0xd0] sm:$0xff]
        %v902 = vld [vmem:[%s314 + $0xd8] sm:$0xff]
        %v903 = vld [vmem:[%s314 + $0xe0] sm:$0xff]
        %v904 = vld [vmem:[%s314 + $0xe8] sm:$0xff]
        %v905 = vld [vmem:[%s314 + $0xf0] sm:$0xff]
        %v906 = vld [vmem:[%s314 + $0xf8] sm:$0xff]
        %v907 = vld [vmem:[%s314 + $0x100] sm:$0xff]
        %v908 = vld [vmem:[%s314 + $0x108] sm:$0xff]
        %v909 = vld [vmem:[%s314 + $0x110] sm:$0xff]
        %v910 = vld [vmem:[%s314 + $0x118] sm:$0xff]
        %v911 = vld [vmem:[%s314 + $0x120] sm:$0xff]
        %v912 = vld [vmem:[%s314 + $0x128] sm:$0xff]
        %v913 = vld [vmem:[%s314 + $0x130] sm:$0xff]
        %v914 = vld [vmem:[%s314 + $0x138] sm:$0xff]
        %v915 = vld [vmem:[%s314 + $0x140] sm:$0xff]
        %v916 = vld [vmem:[%s314 + $0x148] sm:$0xff]
        %v917 = vld [vmem:[%s314 + $0x150] sm:$0xff]
        %v918 = vld [vmem:[%s314 + $0x158] sm:$0xff]
        %v919 = vld [vmem:[%s314 + $0x160] sm:$0xff]
        %v920 = vld [vmem:[%s314 + $0x168] sm:$0xff]
        %v921 = vld [vmem:[%s314 + $0x170] sm:$0xff]
        %v922 = vld [vmem:[%s314 + $0x178] sm:$0xff]
        %v923 = vld [vmem:[%s314 + $0x180] sm:$0xff]
        %v924 = vld [vmem:[%s314 + $0x188] sm:$0xff]
        %v925 = vld [vmem:[%s314 + $0x190] sm:$0xff]
        %v926 = vld [vmem:[%s314 + $0x198] sm:$0xff]
        %v927 = vld [vmem:[%s314 + $0x1a0] sm:$0xff]
        %v928 = vld [vmem:[%s314 + $0x1a8] sm:$0xff]
        %v929 = vld [vmem:[%s314 + $0x1b0] sm:$0xff]
        %v930 = vld [vmem:[%s314 + $0x1b8] sm:$0xff]
        %v931 = vld [vmem:[%s314 + $0x1c0] sm:$0xff]
        %v932 = vld [vmem:[%s314 + $0x1c8] sm:$0xff]
        %v933 = vld [vmem:[%s314 + $0x1d0] sm:$0xff]
        %v934 = vld [vmem:[%s314 + $0x1d8] sm:$0xff]
        %v935 = vld [vmem:[%s314 + $0x1e0] sm:$0xff]
        %v936 = vld [vmem:[%s314 + $0x1e8] sm:$0xff]
        %v937 = vld [vmem:[%s314 + $0x1f0] sm:$0xff]
        %v938 = vld [vmem:[%s314 + $0x1f8] sm:$0xff]
        %939 = vmatprep.subr.mxu0 0.0
        %940 = vmatpush1.msra.mxu0 %v875
        %941 = vmatprep.subr.mxu0 0.0
        %942 = vmatpush1.msra.mxu0 %v876
        %943 = vmatprep.subr.mxu0 0.0
        %944 = vmatpush1.msra.mxu0 %v877
        %945 = vmatprep.subr.mxu0 0.0
        %946 = vmatpush1.msra.mxu0 %v878
        %947 = vmatprep.subr.mxu0 0.0
        %948 = vmatpush1.msra.mxu0 %v879
        %949 = vmatprep.subr.mxu0 0.0
        %950 = vmatpush1.msra.mxu0 %v880
        %951 = vmatprep.subr.mxu0 0.0
        %952 = vmatpush1.msra.mxu0 %v881
        %953 = vmatprep.subr.mxu0 0.0
        %954 = vmatpush1.msra.mxu0 %v882
        %955 = vmatprep.subr.mxu0 0.0
        %956 = vmatpush1.msra.mxu0 %v883
        %957 = vmatprep.subr.mxu0 0.0
        %958 = vmatpush1.msra.mxu0 %v884
        %959 = vmatprep.subr.mxu0 0.0
        %960 = vmatpush1.msra.mxu0 %v885
        %961 = vmatprep.subr.mxu0 0.0
        %962 = vmatpush1.msra.mxu0 %v886
        %963 = vmatprep.subr.mxu0 0.0
        %964 = vmatpush1.msra.mxu0 %v887
        %965 = vmatprep.subr.mxu0 0.0
        %966 = vmatpush1.msra.mxu0 %v888
        %967 = vmatprep.subr.mxu0 0.0
        %968 = vmatpush1.msra.mxu0 %v889
        %969 = vmatprep.subr.mxu0 0.0
        %970 = vmatpush1.msra.mxu0 %v890
        %971 = vmatprep.subr.mxu0 0.0
        %972 = vmatpush1.msra.mxu0 %v891
        %973 = vmatprep.subr.mxu0 0.0
        %974 = vmatpush1.msra.mxu0 %v892
        %975 = vmatprep.subr.mxu0 0.0
        %976 = vmatpush1.msra.mxu0 %v893
        %977 = vmatprep.subr.mxu0 0.0
        %978 = vmatpush1.msra.mxu0 %v894
        %979 = vmatprep.subr.mxu0 0.0
        %980 = vmatpush1.msra.mxu0 %v895
        %981 = vmatprep.subr.mxu0 0.0
        %982 = vmatpush1.msra.mxu0 %v896
        %983 = vmatprep.subr.mxu0 0.0
        %984 = vmatpush1.msra.mxu0 %v897
        %985 = vmatprep.subr.mxu0 0.0
        %986 = vmatpush1.msra.mxu0 %v898
        %987 = vmatprep.subr.mxu0 0.0
        %988 = vmatpush1.msra.mxu0 %v899
        %989 = vmatprep.subr.mxu0 0.0
        %990 = vmatpush1.msra.mxu0 %v900
        %991 = vmatprep.subr.mxu0 0.0
        %992 = vmatpush1.msra.mxu0 %v901
        %993 = vmatprep.subr.mxu0 0.0
        %994 = vmatpush1.msra.mxu0 %v902
        %995 = vmatprep.subr.mxu0 0.0
        %996 = vmatpush1.msra.mxu0 %v903
        %997 = vmatprep.subr.mxu0 0.0
        %998 = vmatpush1.msra.mxu0 %v904
        %999 = vmatprep.subr.mxu0 0.0
        %1000 = vmatpush1.msra.mxu0 %v905
        %1001 = vmatprep.subr.mxu0 0.0
        %1002 = vmatpush1.msra.mxu0 %v906
        %1003 = vmatprep.mubr.f32.mxu0 %v796
        %1004 = vmatmul.mubr.f32.gmra.mrb[0].mxu0 %v795
        %v1005 = vpop.f32.mrb[0].mxu0
        %v1006 = vadd.f32 0.0, %v1005
        %v1007 = vpop.f32.mrb[0].mxu0
        %1008 = vmatprep.mubr.f32.mxu0 %v800
        %1009 = vmatmul.mubr.f32.gmra.mrb[0].mxu0 %v799
        %v1010 = vpop.f32.mrb[0].mxu0
        %v1011 = vadd.f32 0.0, %v1010
        %v1012 = vpop.f32.mrb[0].mxu0
        %1013 = vmatprep.mubr.f32.mxu0 %v804
        %1014 = vmatmul.mubr.f32.gmra.mrb[0].mxu0 %v803
        %v1015 = vpop.f32.mrb[0].mxu0
        %v1016 = vadd.f32 0.0, %v1015
        %v1017 = vpop.f32.mrb[0].mxu0
        %1018 = vmatprep.mubr.f32.mxu0 %v808
        %1019 = vmatmul.mubr.f32.gmra.mrb[0].mxu0 %v807
        %v1020 = vpop.f32.mrb[0].mxu0
        %v1021 = vadd.f32 0.0, %v1020
        %v1022 = vpop.f32.mrb[0].mxu0
        %1023 = vmatprep.mubr.f32.mxu0 %v812
        %1024 = vmatmul.mubr.f32.gmra.mrb[0].mxu0 %v811
        %v1025 = vpop.f32.mrb[0].mxu0
        %v1026 = vadd.f32 0.0, %v1025
        %v1027 = vpop.f32.mrb[0].mxu0
        %1028 = vmatprep.mubr.f32.mxu0 %v816
        %1029 = vmatmul.mubr.f32.gmra.mrb[0].mxu0 %v815
        %v1030 = vpop.f32.mrb[0].mxu0
        %v1031 = vadd.f32 0.0, %v1030
        %v1032 = vpop.f32.mrb[0].mxu0
        %1033 = vmatprep.mubr.f32.mxu0 %v820
        %1034 = vmatmul.mubr.f32.gmra.mrb[0].mxu0 %v819
        %v1035 = vpop.f32.mrb[0].mxu0
        %v1036 = vadd.f32 0.0, %v1035
        %v1037 = vpop.f32.mrb[0].mxu0
        %1038 = vmatprep.mubr.f32.mxu0 %v824
        %1039 = vmatmul.mubr.f32.gmra.mrb[0].mxu0 %v823
        %v1040 = vpop.f32.mrb[0].mxu0
        %v1041 = vadd.f32 0.0, %v1040
        %v1042 = vpop.f32.mrb[0].mxu0
        %1043 = vmatprep.mubr.f32.mxu0 %v828
        %1044 = vmatmul.mubr.f32.gmra.mrb[0].mxu0 %v827
        %v1045 = vpop.f32.mrb[0].mxu0
        %v1046 = vadd.f32 0.0, %v1045
        %v1047 = vpop.f32.mrb[0].mxu0
        %1048 = vmatprep.mubr.f32.mxu0 %v832
        %1049 = vmatmul.mubr.f32.gmra.mrb[0].mxu0 %v831
        %v1050 = vpop.f32.mrb[0].mxu0
        %v1051 = vadd.f32 0.0, %v1050
        %v1052 = vpop.f32.mrb[0].mxu0
        %1053 = vmatprep.mubr.f32.mxu0 %v836
        %1054 = vmatmul.mubr.f32.gmra.mrb[0].mxu0 %v835
        %v1055 = vpop.f32.mrb[0].mxu0
        %v1056 = vadd.f32 0.0, %v1055
        %v1057 = vpop.f32.mrb[0].mxu0
        %1058 = vmatprep.mubr.f32.mxu0 %v840
        %1059 = vmatmul.mubr.f32.gmra.mrb[0].mxu0 %v839
        %v1060 = vpop.f32.mrb[0].mxu0
        %v1061 = vadd.f32 0.0, %v1060
        %v1062 = vpop.f32.mrb[0].mxu0
        %1063 = vmatprep.mubr.f32.mxu0 %v844
        %1064 = vmatmul.mubr.f32.gmra.mrb[0].mxu0 %v843
        %v1065 = vpop.f32.mrb[0].mxu0
        %v1066 = vadd.f32 0.0, %v1065
        %v1067 = vpop.f32.mrb[0].mxu0
        %1068 = vmatprep.mubr.f32.mxu0 %v848
        %1069 = vmatmul.mubr.f32.gmra.mrb[0].mxu0 %v847
        %v1070 = vpop.f32.mrb[0].mxu0
        %v1071 = vadd.f32 0.0, %v1070
        %v1072 = vpop.f32.mrb[0].mxu0
        %1073 = vmatprep.mubr.f32.mxu0 %v852
        %1074 = vmatmul.mubr.f32.gmra.mrb[0].mxu0 %v851
        %v1075 = vpop.f32.mrb[0].mxu0
        %v1076 = vadd.f32 0.0, %v1075
        %v1077 = vpop.f32.mrb[0].mxu0
        %1078 = vmatprep.mubr.f32.mxu0 %v856
        %1079 = vmatmul.mubr.f32.gmra.mrb[0].mxu0 %v855
        %v1080 = vpop.f32.mrb[0].mxu0
        %v1081 = vadd.f32 0.0, %v1080
        %v1082 = vpop.f32.mrb[0].mxu0
        %1083 = vdwg.mxu0
        %1084 = vmatprep.subr.mxu0 0.0
        %1085 = vmatpush1.msra.mxu0 %v907
        %1086 = vmatprep.subr.mxu0 0.0
        %1087 = vmatpush1.msra.mxu0 %v908
        %1088 = vmatprep.subr.mxu0 0.0
        %1089 = vmatpush1.msra.mxu0 %v909
        %1090 = vmatprep.subr.mxu0 0.0
        %1091 = vmatpush1.msra.mxu0 %v910
        %1092 = vmatprep.subr.mxu0 0.0
        %1093 = vmatpush1.msra.mxu0 %v911
        %1094 = vmatprep.subr.mxu0 0.0
        %1095 = vmatpush1.msra.mxu0 %v912
        %1096 = vmatprep.subr.mxu0 0.0
        %1097 = vmatpush1.msra.mxu0 %v913
        %1098 = vmatprep.subr.mxu0 0.0
        %1099 = vmatpush1.msra.mxu0 %v914
        %1100 = vmatprep.subr.mxu0 0.0
        %1101 = vmatpush1.msra.mxu0 %v915
        %1102 = vmatprep.subr.mxu0 0.0
        %1103 = vmatpush1.msra.mxu0 %v916
        %1104 = vmatprep.subr.mxu0 0.0
        %1105 = vmatpush1.msra.mxu0 %v917
        %1106 = vmatprep.subr.mxu0 0.0
        %1107 = vmatpush1.msra.mxu0 %v918
        %1108 = vmatprep.subr.mxu0 0.0
        %1109 = vmatpush1.msra.mxu0 %v919
        %1110 = vmatprep.subr.mxu0 0.0
        %1111 = vmatpush1.msra.mxu0 %v920
        %1112 = vmatprep.subr.mxu0 0.0
        %1113 = vmatpush1.msra.mxu0 %v921
        %1114 = vmatprep.subr.mxu0 0.0
        %1115 = vmatpush1.msra.mxu0 %v922
        %1116 = vmatprep.subr.mxu0 0.0
        %1117 = vmatpush1.msra.mxu0 %v923
        %1118 = vmatprep.subr.mxu0 0.0
        %1119 = vmatpush1.msra.mxu0 %v924
        %1120 = vmatprep.subr.mxu0 0.0
        %1121 = vmatpush1.msra.mxu0 %v925
        %1122 = vmatprep.subr.mxu0 0.0
        %1123 = vmatpush1.msra.mxu0 %v926
        %1124 = vmatprep.subr.mxu0 0.0
        %1125 = vmatpush1.msra.mxu0 %v927
        %1126 = vmatprep.subr.mxu0 0.0
        %1127 = vmatpush1.msra.mxu0 %v928
        %1128 = vmatprep.subr.mxu0 0.0
        %1129 = vmatpush1.msra.mxu0 %v929
        %1130 = vmatprep.subr.mxu0 0.0
        %1131 = vmatpush1.msra.mxu0 %v930
        %1132 = vmatprep.subr.mxu0 0.0
        %1133 = vmatpush1.msra.mxu0 %v931
        %1134 = vmatprep.subr.mxu0 0.0
        %1135 = vmatpush1.msra.mxu0 %v932
        %1136 = vmatprep.subr.mxu0 0.0
        %1137 = vmatpush1.msra.mxu0 %v933
        %1138 = vmatprep.subr.mxu0 0.0
        %1139 = vmatpush1.msra.mxu0 %v934
        %1140 = vmatprep.subr.mxu0 0.0
        %1141 = vmatpush1.msra.mxu0 %v935
        %1142 = vmatprep.subr.mxu0 0.0
        %1143 = vmatpush1.msra.mxu0 %v936
        %1144 = vmatprep.subr.mxu0 0.0
        %1145 = vmatpush1.msra.mxu0 %v937
        %1146 = vmatprep.subr.mxu0 0.0
        %1147 = vmatpush1.msra.mxu0 %v938
        %1148 = vmatprep.mubr.f32.mxu0 %v798
        %1149 = vmatmul.mubr.f32.gmra.mrb[0].mxu0 %v797
        %v1150 = vpop.f32.mrb[0].mxu0
        %v1151 = vadd.f32 %v1006, %v1150
        %v1152 = vpop.f32.mrb[0].mxu0
        %1153 = vmatprep.mubr.f32.mxu0 %v802
        %1154 = vmatmul.mubr.f32.gmra.mrb[0].mxu0 %v801
        %v1155 = vpop.f32.mrb[0].mxu0
        %v1156 = vadd.f32 %v1011, %v1155
        %v1157 = vpop.f32.mrb[0].mxu0
        %1158 = vmatprep.mubr.f32.mxu0 %v806
        %1159 = vmatmul.mubr.f32.gmra.mrb[0].mxu0 %v805
        %v1160 = vpop.f32.mrb[0].mxu0
        %v1161 = vadd.f32 %v1016, %v1160
        %v1162 = vpop.f32.mrb[0].mxu0
        %1163 = vmatprep.mubr.f32.mxu0 %v810
        %1164 = vmatmul.mubr.f32.gmra.mrb[0].mxu0 %v809
        %v1165 = vpop.f32.mrb[0].mxu0
        %v1166 = vadd.f32 %v1021, %v1165
        %v1167 = vpop.f32.mrb[0].mxu0
        %1168 = vmatprep.mubr.f32.mxu0 %v814
        %1169 = vmatmul.mubr.f32.gmra.mrb[0].mxu0 %v813
        %v1170 = vpop.f32.mrb[0].mxu0
        %v1171 = vadd.f32 %v1026, %v1170
        %v1172 = vpop.f32.mrb[0].mxu0
        %1173 = vmatprep.mubr.f32.mxu0 %v818
        %1174 = vmatmul.mubr.f32.gmra.mrb[0].mxu0 %v817
        %v1175 = vpop.f32.mrb[0].mxu0
        %v1176 = vadd.f32 %v1031, %v1175
        %v1177 = vpop.f32.mrb[0].mxu0
        %1178 = vmatprep.mubr.f32.mxu0 %v822
        %1179 = vmatmul.mubr.f32.gmra.mrb[0].mxu0 %v821
        %v1180 = vpop.f32.mrb[0].mxu0
        %v1181 = vadd.f32 %v1036, %v1180
        %v1182 = vpop.f32.mrb[0].mxu0
        %1183 = vmatprep.mubr.f32.mxu0 %v826
        %1184 = vmatmul.mubr.f32.gmra.mrb[0].mxu0 %v825
        %v1185 = vpop.f32.mrb[0].mxu0
        %v1186 = vadd.f32 %v1041, %v1185
        %v1187 = vpop.f32.mrb[0].mxu0
        %1188 = vmatprep.mubr.f32.mxu0 %v830
        %1189 = vmatmul.mubr.f32.gmra.mrb[0].mxu0 %v829
        %v1190 = vpop.f32.mrb[0].mxu0
        %v1191 = vadd.f32 %v1046, %v1190
        %v1192 = vpop.f32.mrb[0].mxu0
        %1193 = vmatprep.mubr.f32.mxu0 %v834
        %1194 = vmatmul.mubr.f32.gmra.mrb[0].mxu0 %v833
        %v1195 = vpop.f32.mrb[0].mxu0
        %v1196 = vadd.f32 %v1051, %v1195
        %v1197 = vpop.f32.mrb[0].mxu0
        %1198 = vmatprep.mubr.f32.mxu0 %v838
        %1199 = vmatmul.mubr.f32.gmra.mrb[0].mxu0 %v837
        %v1200 = vpop.f32.mrb[0].mxu0
        %v1201 = vadd.f32 %v1056, %v1200
        %v1202 = vpop.f32.mrb[0].mxu0
        %1203 = vmatprep.mubr.f32.mxu0 %v842
        %1204 = vmatmul.mubr.f32.gmra.mrb[0].mxu0 %v841
        %v1205 = vpop.f32.mrb[0].mxu0
        %v1206 = vadd.f32 %v1061, %v1205
        %v1207 = vpop.f32.mrb[0].mxu0
        %1208 = vmatprep.mubr.f32.mxu0 %v846
        %1209 = vmatmul.mubr.f32.gmra.mrb[0].mxu0 %v845
        %v1210 = vpop.f32.mrb[0].mxu0
        %v1211 = vadd.f32 %v1066, %v1210
        %v1212 = vpop.f32.mrb[0].mxu0
        %1213 = vmatprep.mubr.f32.mxu0 %v850
        %1214 = vmatmul.mubr.f32.gmra.mrb[0].mxu0 %v849
        %v1215 = vpop.f32.mrb[0].mxu0
        %v1216 = vadd.f32 %v1071, %v1215
        %v1217 = vpop.f32.mrb[0].mxu0
        %1218 = vmatprep.mubr.f32.mxu0 %v854
        %1219 = vmatmul.mubr.f32.gmra.mrb[0].mxu0 %v853
        %v1220 = vpop.f32.mrb[0].mxu0
        %v1221 = vadd.f32 %v1076, %v1220
        %v1222 = vpop.f32.mrb[0].mxu0
        %1223 = vmatprep.mubr.f32.mxu0 %v858
        %1224 = vmatmul.mubr.f32.gmra.mrb[0].mxu0 %v857
        %v1225 = vpop.f32.mrb[0].mxu0
        %v1226 = vadd.f32 %v1081, %v1225
        %v1227 = vpop.f32.mrb[0].mxu0
        %1228 = vdwg.mxu0
        %v1229 = vadd.f32 %v859, %v1151
        %v1230 = vadd.f32 %v860, %v1156
        %v1231 = vadd.f32 %v861, %v1161
        %v1232 = vadd.f32 %v862, %v1166
        %v1233 = vadd.f32 %v863, %v1171
        %v1234 = vadd.f32 %v864, %v1176
        %v1235 = vadd.f32 %v865, %v1181
        %v1236 = vadd.f32 %v866, %v1186
        %v1237 = vadd.f32 %v867, %v1191
        %v1238 = vadd.f32 %v868, %v1196
        %v1239 = vadd.f32 %v869, %v1201
        %v1240 = vadd.f32 %v870, %v1206
        %v1241 = vadd.f32 %v871, %v1211
        %v1242 = vadd.f32 %v872, %v1216
        %v1243 = vadd.f32 %v873, %v1221
        %v1244 = vadd.f32 %v874, %v1226
        %1245 = vst [vmem:[#allocation2] sm:$0xff] %v1229
        %1246 = vst [vmem:[#allocation2 + $0x8] sm:$0xff] %v1230
        %1247 = vst [vmem:[#allocation2 + $0x10] sm:$0xff] %v1231
        %1248 = vst [vmem:[#allocation2 + $0x18] sm:$0xff] %v1232
        %1249 = vst [vmem:[#allocation2 + $0x20] sm:$0xff] %v1233
        %1250 = vst [vmem:[#allocation2 + $0x28] sm:$0xff] %v1234
        %1251 = vst [vmem:[#allocation2 + $0x30] sm:$0xff] %v1235
        %1252 = vst [vmem:[#allocation2 + $0x38] sm:$0xff] %v1236
        %1253 = vst [vmem:[#allocation2 + $0x40] sm:$0xff] %v1237
        %1254 = vst [vmem:[#allocation2 + $0x48] sm:$0xff] %v1238
        %1255 = vst [vmem:[#allocation2 + $0x50] sm:$0xff] %v1239
        %1256 = vst [vmem:[#allocation2 + $0x58] sm:$0xff] %v1240
        %1257 = vst [vmem:[#allocation2 + $0x60] sm:$0xff] %v1241
        %1258 = vst [vmem:[#allocation2 + $0x68] sm:$0xff] %v1242
        %1259 = vst [vmem:[#allocation2 + $0x70] sm:$0xff] %v1243
        %1260 = vst [vmem:[#allocation2 + $0x78] sm:$0xff] %v1244
        %p1261 = scmp.eq.s32.totalorder %s29, 1
        // Predicated region
        $region61: #{tpu_custom_call.1} parent=39 // pred_check
          %p1262 = pneg %p1261
        $region62: #{tpu_custom_call.1} parent=39 // pred_check_branch
          %1264 = sbr.rel (%p1262) target = $region64
        $region63: #{tpu_custom_call.1} parent=39 // pred_region
          %v1265 = vld [vmem:[#allocation2] sm:$0xff]
          %v1266 = vld [vmem:[#allocation2 + $0x8] sm:$0xff]
          %v1267 = vld [vmem:[#allocation2 + $0x10] sm:$0xff]
          %v1268 = vld [vmem:[#allocation2 + $0x18] sm:$0xff]
          %v1269 = vld [vmem:[#allocation2 + $0x20] sm:$0xff]
          %v1270 = vld [vmem:[#allocation2 + $0x28] sm:$0xff]
          %v1271 = vld [vmem:[#allocation2 + $0x30] sm:$0xff]
          %v1272 = vld [vmem:[#allocation2 + $0x38] sm:$0xff]
          %v1273 = vld [vmem:[#allocation2 + $0x40] sm:$0xff]
          %v1274 = vld [vmem:[#allocation2 + $0x48] sm:$0xff]
          %v1275 = vld [vmem:[#allocation2 + $0x50] sm:$0xff]
          %v1276 = vld [vmem:[#allocation2 + $0x58] sm:$0xff]
          %v1277 = vld [vmem:[#allocation2 + $0x60] sm:$0xff]
          %v1278 = vld [vmem:[#allocation2 + $0x68] sm:$0xff]
          %v1279 = vld [vmem:[#allocation2 + $0x70] sm:$0xff]
          %v1280 = vld [vmem:[#allocation2 + $0x78] sm:$0xff]
          %v1281 = vld [vmem:[%s4] sm:$0x1]
          %v1283 = vlaneseq
          %v1284 = vshrl.u32 %v1283, 7
          %v1285 = vsub.s32 0, %v1284
          %v1286 = vrot.slane %v1281, %v1285
          %v1288 = vadd.f32 %v1265, %v1286
          %v1289 = vadd.f32 %v1266, %v1286
          %v1290 = vadd.f32 %v1267, %v1286
          %v1291 = vadd.f32 %v1268, %v1286
          %v1292 = vadd.f32 %v1269, %v1286
          %v1293 = vadd.f32 %v1270, %v1286
          %v1294 = vadd.f32 %v1271, %v1286
          %v1295 = vadd.f32 %v1272, %v1286
          %v1296 = vadd.f32 %v1273, %v1286
          %v1297 = vadd.f32 %v1274, %v1286
          %v1298 = vadd.f32 %v1275, %v1286
          %v1299 = vadd.f32 %v1276, %v1286
          %v1300 = vadd.f32 %v1277, %v1286
          %v1301 = vadd.f32 %v1278, %v1286
          %v1302 = vadd.f32 %v1279, %v1286
          %v1303 = vadd.f32 %v1280, %v1286
          %1304 = vst [vmem:[#allocation11] sm:$0xff] %v1288
          %1305 = vst [vmem:[#allocation11 + $0x8] sm:$0xff] %v1289
          %1306 = vst [vmem:[#allocation11 + $0x10] sm:$0xff] %v1290
          %1307 = vst [vmem:[#allocation11 + $0x18] sm:$0xff] %v1291
          %1308 = vst [vmem:[#allocation11 + $0x20] sm:$0xff] %v1292
          %1309 = vst [vmem:[#allocation11 + $0x28] sm:$0xff] %v1293
          %1310 = vst [vmem:[#allocation11 + $0x30] sm:$0xff] %v1294
          %1311 = vst [vmem:[#allocation11 + $0x38] sm:$0xff] %v1295
          %1312 = vst [vmem:[#allocation11 + $0x40] sm:$0xff] %v1296
          %1313 = vst [vmem:[#allocation11 + $0x48] sm:$0xff] %v1297
          %1314 = vst [vmem:[#allocation11 + $0x50] sm:$0xff] %v1298
          %1315 = vst [vmem:[#allocation11 + $0x58] sm:$0xff] %v1299
          %1316 = vst [vmem:[#allocation11 + $0x60] sm:$0xff] %v1300
          %1317 = vst [vmem:[#allocation11 + $0x68] sm:$0xff] %v1301
          %1318 = vst [vmem:[#allocation11 + $0x70] sm:$0xff] %v1302
          %1319 = vst [vmem:[#allocation11 + $0x78] sm:$0xff] %v1303
        $region64: #{tpu_custom_call.1} parent=39 // pred_fallthru
          _
        // Predicated region
        $region65: #{tpu_custom_call.1} parent=39 // pred_check
          %p1320 = pneg %p179
        $region66: #{tpu_custom_call.1} parent=39 // pred_check_branch
          %1322 = sbr.rel (%p1320) target = $region68
        $region67: #{tpu_custom_call.1} parent=39 // pred_region
          %s1323 = smul.u32 16, %s28
          %s1325 = ssub.s32 2048, 2048
          %1326 = vsyncadd [#allocation5], %s1325
          %s1327 = smul.addr %s1323, 128
          %s1328 = scalar_lea.hbm %s5, %s1327
          %s1329 = sshll.u32 [#allocation11], 4
          %s1330 = int_to_ptr.vmem [resolvable:$true] %s1329
          %1335 = dma.vmem_to_hbm [thread:$0]  %s1330, 2048, %s1328, [#allocation5], 128, 128, 8
        $region68: #{tpu_custom_call.1} parent=39 // pred_fallthru
          _
        // Predicated region
        $region69: #{tpu_custom_call.1} parent=39 // pred_check
          %p1336 = pneg %p179
        $region70: #{tpu_custom_call.1} parent=39 // pred_check_branch
          %1338 = sbr.rel (%p1336) target = $region72
        $region71: #{tpu_custom_call.1} parent=39 // pred_region
          %1339 = dma.done [#allocation5], 2048
        $region72: #{tpu_custom_call.1} parent=39 // pred_fallthru
          _
      $region40: #{tpu_custom_call.1} parent=5 // pred_fallthru
        _
      %p1340 = scmp.le.s32.totalorder 2, %s19
      // Predicated region
      $region73: #{tpu_custom_call.1} parent=5 // pred_check
        %p1341 = pneg %p1340
      $region74: #{tpu_custom_call.1} parent=5 // pred_check_branch
        %1343 = sbr.rel (%p1341) target = $region76
      $region75: #{tpu_custom_call.1} parent=5 // pred_region
        %s1344 = ssub.s32 %s19, 2
      $region76: #{tpu_custom_call.1} parent=5 // pred_fallthru
        _
    $region6: #{tpu_custom_call.1} parent=1 // loop_footer
      %s23 = sadd.s32 1, %s19
    $region7: #{tpu_custom_call.1} parent=1 // loop_footer_branch
      %18 = sbr.rel target = $region3
    $region8: #{tpu_custom_call.1} parent=1 // loop_exit
      _
    %1345 = vsyncpa [#allocation4], 1
    %s1346 = scalar_lea.sflag [#allocation4], 1
    %1347 = vsyncpa %s1346, 1
    %1348 = vsyncpa [#allocation7], 1
    %s1349 = scalar_lea.sflag [#allocation7], 1
    %1350 = vsyncpa %s1349, 1
    %1351 = vsyncpa [#allocation10], 1
    %s1352 = scalar_lea.sflag [#allocation10], 1
    %1353 = vsyncpa %s1352, 1
    %1354 = vsyncpa [#allocation5], 1
    %s1355 = scalar_lea.sflag [#allocation5], 1
    %1356 = vsyncpa %s1355, 1

</llo_original>
